<compile_context>
chip_gen: v5e
topology: v5e:2x2
jax: 0.10.0
libtpu: 0.0.40
codegen_flags: <defaults>
</compile_context>

<pallas_src>
import math
import numpy as np

import jax
import jax.numpy as jnp
from jax import lax
from jax.experimental import pallas as pl
from jax.experimental.pallas import tpu as pltpu


BT_DEC = 128   # output-column chunk width for strided-conv decimation matmuls


# ----------------------------- static helpers ------------------------------

def _pad_amounts(L, K, stride, dilation=1):
    """audiocraft StreamableConv1d non-causal padding amounts (static ints)."""
    eff_k = (K - 1) * dilation + 1
    padding_total = eff_k - stride
    n_frames = (L - eff_k + padding_total) / stride + 1
    ideal_length = (math.ceil(n_frames) - 1) * stride + (eff_k - padding_total)
    extra = int(ideal_length - L)
    pad_right = padding_total // 2
    pad_left = padding_total - pad_right
    return pad_left, pad_right + extra


def _pick_vmem_limit():
    # ~3/4 of physical VMEM, capped at 100 MiB (v5e/v6e: 128 MiB -> 96 MiB,
    # v7x: 64 MiB -> 48 MiB).  Fallback is safe on all generations.
    try:
        cap = int(pltpu.get_tpu_info().vmem_capacity_bytes)
        return int(min(cap * 3 // 4, 100 * 1024 * 1024))
    except Exception:
        return 48 * 1024 * 1024


# --------------------------- in-kernel primitives ---------------------------

def _elu(x):
    # torch.nn.ELU(alpha=1.0): x if x > 0 else exp(x) - 1
    return jnp.where(x > 0, x, jnp.exp(jnp.minimum(x, 0.0)) - 1.0)


# ------------------------------ fused kernel --------------------------------

def _build_kernel(plan, n_w, S, nbits):
    def kernel(*refs):
        x_ref = refs[0]
        w_refs = refs[1:1 + n_w]
        probs_ref = refs[1 + n_w]
        msg_ref = refs[2 + n_w]
        scratch = refs[3 + n_w:]

        # chunk-invariant decimation matrices, built once per distinct shape
        gdec_cache = {}

        def _gdec(wf, clen, s):
            key = (wf, clen, s)
            if key not in gdec_cache:
                jj = lax.broadcasted_iota(jnp.int32, (wf, clen), 0)
                tt = lax.broadcasted_iota(jnp.int32, (wf, clen), 1)
                gdec_cache[key] = (jj == s * tt).astype(jnp.bfloat16)
            return gdec_cache[key]

        h = x_ref[0].astype(jnp.float32)           # (Cin0, T)
        saved = None
        wi = 0
        for op in plan:
            w_ref, b_ref = w_refs[wi], w_refs[wi + 1]
            wi += 2
            if op["save_res"]:
                saved = h                          # identity skip input
            xin = _elu(h) if op["pre_elu"] else h  # ELU once, before padding
            K, s, Cin = op["K"], op["stride"], op["Cin"]
            L_in, L_out = op["L_in"], op["L_out"]
            pad_l, pad_r = op["pad_l"], op["pad_r"]

            if K == 1 and s == 1:
                # 1x1 conv: plain matmul, no padding / tap handling
                y = jnp.dot(w_ref[...], xin.astype(jnp.bfloat16),
                            preferred_element_type=jnp.float32) + b_ref[...]
            else:
                # ---- O(L) reflect padding into a VMEM scratch ----
                pbuf = scratch[op["pbuf"]]
                pbuf[:, pad_l:pad_l + L_in] = xin
                for i in range(pad_l):
                    src = pad_l - i
                    pbuf[:, i:i + 1] = xin[:, src:src + 1]
                for j in range(pad_r):
                    dst = pad_l + L_in + j
                    src = L_in - 2 - j
                    pbuf[:, dst:dst + 1] = xin[:, src:src + 1]

                if s == 1:
                    # ---- tap-fused conv: one deep-contraction MXU matmul ----
                    sbuf = scratch[op["sbuf"]]
                    for k in range(K):
                        sbuf[k * Cin:(k + 1) * Cin, :] = pbuf[:, k:k + L_out]
                    y = jnp.dot(w_ref[...], sbuf[...].astype(jnp.bfloat16),
                                preferred_element_type=jnp.float32) + b_ref[...]
                else:
                    # ---- strided conv: per-chunk full-rate conv + small
                    #      chunk-invariant decimation matmul (O(L) total) ----
                    ybuf = scratch[op["ybuf"]]
                    for c in range(op["n_chunks"]):
                        t0 = c * BT_DEC
                        clen = min(BT_DEC, L_out - t0)
                        wf = s * (clen - 1) + 1
                        base = s * t0
                        acc = None
                        for k in range(K):
                            xk = pbuf[:, base + k:base + k + wf]
                            wk = w_ref[:, k * Cin:(k + 1) * Cin]
                            term = jnp.dot(wk, xk.astype(jnp.bfloat16),
                                           preferred_element_type=jnp.float32)
                            acc = term if acc is None else acc + term
                        y_c = jnp.dot(acc.astype(jnp.bfloat16),
                                      _gdec(wf, clen, s),
                                      preferred_element_type=jnp.float32)
                        ybuf[:, t0:t0 + clen] = y_c + b_ref[...]
                    y = ybuf[...]

            if op["add_res"]:
                y = y + saved
            h = y

        # ---- fused ConvTranspose(k=stride=S) + 1x1 detector conv head ----
        # comp_w rows ordered (channel c, tap k) -> c*S + k, so the detection
        # channels and message bits come out as contiguous sublane slabs.
        cw_ref, cb_ref = w_refs[wi], w_refs[wi + 1]
        R = jnp.dot(cw_ref[...], h.astype(jnp.bfloat16),
                    preferred_element_type=jnp.float32) + cb_ref[...]
        det0 = R[0:S, :]                      # (S, T_z)
        det1 = R[S:2 * S, :]
        # softmax over the 2 detection channels == stable sigmoid(det1 - det0)
        d = det1 - det0
        ed = jnp.exp(-jnp.abs(d))
        p1 = jnp.where(d >= 0, 1.0 / (1.0 + ed), ed / (1.0 + ed))
        probs_ref[0, 0, :, :] = 1.0 - p1
        probs_ref[0, 1, :, :] = p1
        msg_ref[0] = R[2 * S:, :]             # raw message logits (nbits*S, T_z)

    return kernel


# ------------------------------- forward ------------------------------------

def audioseal_detector_forward(params, config, x):
    """x: (B, channels, T) float32 -> (probs (B, 2, T), message (B, nbits))."""
    B, Cin0, orig_t = x.shape
    nbits = int(config["nbits"])
    S = int(config["stride_total"])
    assert nbits >= 1

    plan, weights, scratch_shapes = [], [], []
    L = orig_t

    def add_conv(name, *, stride=1, pre_elu=False, save_res=False, add_res=False):
        nonlocal L
        w, b = params[name]                                  # torch (Cout, Cin, K)
        Cout, Cin, K = (int(d) for d in w.shape)
        # (Cout, K*Cin), columns tap-major: col = k*Cin + c
        weights.append(jnp.transpose(w, (0, 2, 1)).reshape(Cout, K * Cin)
                       .astype(jnp.bfloat16))
        weights.append(b.reshape(-1, 1).astype(jnp.float32))
        pad_l, pad_r = _pad_amounts(L, K, stride)
        L_in, L_pad = L, L + pad_l + pad_r
        L_out = (L_pad - K) // stride + 1
        assert pad_l <= L_in - 1 and pad_r <= L_in - 1, \
            "reflect pad exceeds input length (input too short for this config)"
        op = dict(K=K, stride=stride, Cin=Cin, Cout=Cout, L_in=L_in, L_out=L_out,
                  L_pad=L_pad, pad_l=pad_l, pad_r=pad_r, pre_elu=pre_elu,
                  save_res=save_res, add_res=add_res,
                  pbuf=None, sbuf=None, ybuf=None, n_chunks=0)
        if not (K == 1 and stride == 1):
            op["pbuf"] = len(scratch_shapes)
            scratch_shapes.append(pltpu.VMEM((Cin, L_pad), jnp.float32))
            if stride == 1:
                op["sbuf"] = len(scratch_shapes)
                scratch_shapes.append(pltpu.VMEM((K * Cin, L_out), jnp.float32))
            else:
                op["n_chunks"] = -(-L_out // BT_DEC)
                op["ybuf"] = len(scratch_shapes)
                scratch_shapes.append(pltpu.VMEM((Cout, L_out), jnp.float32))
        plan.append(op)
        L = L_out

    add_conv("conv_in")
    for i, ratio in enumerate(config["rev_ratios"]):
        add_conv(f"res{i}_c1", pre_elu=True, save_res=True)
        add_conv(f"res{i}_c2", pre_elu=True, add_res=True)
        add_conv(f"down{i}", stride=ratio, pre_elu=True)
    add_conv("conv_out", pre_elu=True)
    T_z = L

    # Pre-compose ConvTranspose1d(k=stride=S) with the 1x1 detector conv so the
    # (B, output_dim, T) intermediate never exists.  Row (c, k) -> c*S + k.
    rev_w, rev_b = params["rev"]            # (dim, output_dim, S), (output_dim,)
    last_w, last_b = params["last"]         # (2+nbits, output_dim, 1), (2+nbits,)
    lw = last_w[:, :, 0]
    comp_w = (jnp.einsum("co,dok->ckd", lw, rev_w)
              .reshape((2 + nbits) * S, -1).astype(jnp.bfloat16))
    comp_b = jnp.repeat(lw @ rev_b + last_b, S).reshape(-1, 1).astype(jnp.float32)
    weights += [comp_w, comp_b]
    n_w = len(weights)

    kernel = _build_kernel(plan, n_w, S, nbits)

    in_specs = [pl.BlockSpec((1, Cin0, orig_t), lambda b: (b, 0, 0))]
    for w in weights:   # full-block, constant index map -> resident across grid
        in_specs.append(pl.BlockSpec(w.shape, lambda b, n=w.ndim: (0,) * n))

    probs_raw, msg_raw = pl.pallas_call(
        kernel,
        out_shape=(jax.ShapeDtypeStruct((B, 2, S, T_z), jnp.float32),
                   jax.ShapeDtypeStruct((B, nbits * S, T_z), jnp.float32)),
        grid=(B,),
        in_specs=in_specs,
        out_specs=(pl.BlockSpec((1, 2, S, T_z), lambda b: (b, 0, 0, 0)),
                   pl.BlockSpec((1, nbits * S, T_z), lambda b: (b, 0, 0))),
        scratch_shapes=scratch_shapes,
        compiler_params=pltpu.CompilerParams(
            dimension_semantics=("parallel",),        # batch across TCs
            vmem_limit_bytes=_pick_vmem_limit()),
    )(x.astype(jnp.float32), *weights)

    # Interleave the S transposed-conv taps (full-rate index = t*S + k) and crop
    # to the original frame count; message mean + sigmoid on the cropped frames.
    # Pure layout plumbing / trivial reduce, done outside the kernel so the
    # kernel's stores stay lane-dense (per performance review).
    T_full = T_z * S
    probs = probs_raw.transpose(0, 1, 3, 2).reshape(B, 2, T_full)[:, :, :orig_t]
    msg_full = (msg_raw.reshape(B, nbits, S, T_z).transpose(0, 1, 3, 2)
                .reshape(B, nbits, T_full)[:, :, :orig_t])
    message = jax.nn.sigmoid(jnp.mean(msg_full, axis=-1))
    return probs, message


# --------------------------- parameter creation ----------------------------

def _init_conv(key, cout, cin, k):
    kw, kb = jax.random.split(key)
    scale = 1.0 / math.sqrt(cin * k)
    w = jax.random.uniform(kw, (cout, cin, k), jnp.float32, -scale, scale)
    b = jax.random.uniform(kb, (cout,), jnp.float32, -scale, scale)
    return w, b


def init_detector_params(key, *, channels=1, n_filters=4, dimension=16,
                         ratios=(4, 2), kernel_size=7, last_kernel_size=7,
                         residual_kernel_size=3, compress=2,
                         output_dim=8, nbits=4):
    keys = iter(jax.random.split(key, 32))
    params = {}
    rev_ratios = list(reversed(list(ratios)))    # SEANet iterates reversed(ratios)
    mult = 1
    params["conv_in"] = _init_conv(next(keys), mult * n_filters, channels, kernel_size)
    for i, ratio in enumerate(rev_ratios):
        dim = mult * n_filters
        hidden = dim // compress
        params[f"res{i}_c1"] = _init_conv(next(keys), hidden, dim, residual_kernel_size)
        params[f"res{i}_c2"] = _init_conv(next(keys), dim, hidden, 1)
        params[f"down{i}"] = _init_conv(next(keys), dim * 2, dim, ratio * 2)
        mult *= 2
    params["conv_out"] = _init_conv(next(keys), dimension, mult * n_filters, last_kernel_size)

    S = int(np.prod(ratios))
    kw, kb = jax.random.split(next(keys))
    scale = 1.0 / math.sqrt(dimension * S)
    params["rev"] = (
        jax.random.uniform(kw, (dimension, output_dim, S), jnp.float32, -scale, scale),
        jax.random.uniform(kb, (output_dim,), jnp.float32, -scale, scale),
    )
    params["last"] = _init_conv(next(keys), 2 + nbits, output_dim, 1)
    config = dict(rev_ratios=rev_ratios, stride_total=S, nbits=nbits)
    return params, config


# --------------------------------- main ------------------------------------

if __name__ == "__main__":
    key = jax.random.PRNGKey(0)
    k_params, k_input = jax.random.split(key)

    B, C_IN, T = 2, 1, 64
    NBITS = 4
    params, config = init_detector_params(k_params, channels=C_IN, nbits=NBITS)

    x = jax.random.normal(k_input, (B, C_IN, T), jnp.float32)

    fwd = jax.jit(lambda p, xx: audioseal_detector_forward(p, config, xx))
    probs, message = fwd(params, x)
    probs = jax.block_until_ready(probs)
    message = jax.block_until_ready(message)

    assert probs.shape == (B, 2, T)
    assert message.shape == (B, NBITS)
    assert bool(jnp.all(jnp.isfinite(probs))) and bool(jnp.all(jnp.isfinite(message)))
    # softmax over the 2 detection channels sums to 1
    assert bool(jnp.allclose(jnp.sum(probs, axis=1), 1.0, atol=1e-5))

    print("KERNEL_OK")
</pallas_src>

<mosaic_0001>
module attributes {stable_mosaic.version = 11 : i64} {
  func.func @kernel(%arg0: i32, %arg1: memref<1x1x64xf32, #tpu.memory_space<vmem>>, %arg2: memref<4x7xbf16, #tpu.memory_space<vmem>>, %arg3: memref<4x1xf32, #tpu.memory_space<vmem>>, %arg4: memref<2x12xbf16, #tpu.memory_space<vmem>>, %arg5: memref<2x1xf32, #tpu.memory_space<vmem>>, %arg6: memref<4x2xbf16, #tpu.memory_space<vmem>>, %arg7: memref<4x1xf32, #tpu.memory_space<vmem>>, %arg8: memref<8x16xbf16, #tpu.memory_space<vmem>>, %arg9: memref<8x1xf32, #tpu.memory_space<vmem>>, %arg10: memref<4x24xbf16, #tpu.memory_space<vmem>>, %arg11: memref<4x1xf32, #tpu.memory_space<vmem>>, %arg12: memref<8x4xbf16, #tpu.memory_space<vmem>>, %arg13: memref<8x1xf32, #tpu.memory_space<vmem>>, %arg14: memref<16x64xbf16, #tpu.memory_space<vmem>>, %arg15: memref<16x1xf32, #tpu.memory_space<vmem>>, %arg16: memref<16x112xbf16, #tpu.memory_space<vmem>>, %arg17: memref<16x1xf32, #tpu.memory_space<vmem>>, %arg18: memref<48x16xbf16, #tpu.memory_space<vmem>>, %arg19: memref<48x1xf32, #tpu.memory_space<vmem>>, %arg20: memref<1x2x8x8xf32, #tpu.memory_space<vmem>>, %arg21: memref<1x32x8xf32, #tpu.memory_space<vmem>>, %arg22: memref<1x70xf32, #tpu.memory_space<vmem>>, %arg23: memref<7x64xf32, #tpu.memory_space<vmem>>, %arg24: memref<4x66xf32, #tpu.memory_space<vmem>>, %arg25: memref<12x64xf32, #tpu.memory_space<vmem>>, %arg26: memref<4x66xf32, #tpu.memory_space<vmem>>, %arg27: memref<8x32xf32, #tpu.memory_space<vmem>>, %arg28: memref<8x34xf32, #tpu.memory_space<vmem>>, %arg29: memref<24x32xf32, #tpu.memory_space<vmem>>, %arg30: memref<8x36xf32, #tpu.memory_space<vmem>>, %arg31: memref<16x8xf32, #tpu.memory_space<vmem>>, %arg32: memref<16x14xf32, #tpu.memory_space<vmem>>, %arg33: memref<112x8xf32, #tpu.memory_space<vmem>>) attributes {dimension_semantics = [#tpu.dimension_semantics<parallel>], iteration_bounds = array<i64: 2>, scalar_prefetch = 0 : i64, scratch_operands = 12 : i64, tpu.core_type = #tpu.core_type<tc>, window_params = [{transform_indices = @transform_0, window_bounds = array<i64: 1, 1, 64>}, {pipeline_mode = #tpu.pipeline_mode<synchronous>, transform_indices = @transform_1, window_bounds = array<i64: 4, 7>}, {pipeline_mode = #tpu.pipeline_mode<synchronous>, transform_indices = @transform_2, window_bounds = array<i64: 4, 1>}, {pipeline_mode = #tpu.pipeline_mode<synchronous>, transform_indices = @transform_3, window_bounds = array<i64: 2, 12>}, {pipeline_mode = #tpu.pipeline_mode<synchronous>, transform_indices = @transform_4, window_bounds = array<i64: 2, 1>}, {pipeline_mode = #tpu.pipeline_mode<synchronous>, transform_indices = @transform_5, window_bounds = array<i64: 4, 2>}, {pipeline_mode = #tpu.pipeline_mode<synchronous>, transform_indices = @transform_6, window_bounds = array<i64: 4, 1>}, {pipeline_mode = #tpu.pipeline_mode<synchronous>, transform_indices = @transform_7, window_bounds = array<i64: 8, 16>}, {pipeline_mode = #tpu.pipeline_mode<synchronous>, transform_indices = @transform_8, window_bounds = array<i64: 8, 1>}, {pipeline_mode = #tpu.pipeline_mode<synchronous>, transform_indices = @transform_9, window_bounds = array<i64: 4, 24>}, {pipeline_mode = #tpu.pipeline_mode<synchronous>, transform_indices = @transform_10, window_bounds = array<i64: 4, 1>}, {pipeline_mode = #tpu.pipeline_mode<synchronous>, transform_indices = @transform_11, window_bounds = array<i64: 8, 4>}, {pipeline_mode = #tpu.pipeline_mode<synchronous>, transform_indices = @transform_12, window_bounds = array<i64: 8, 1>}, {pipeline_mode = #tpu.pipeline_mode<synchronous>, transform_indices = @transform_13, window_bounds = array<i64: 16, 64>}, {pipeline_mode = #tpu.pipeline_mode<synchronous>, transform_indices = @transform_14, window_bounds = array<i64: 16, 1>}, {pipeline_mode = #tpu.pipeline_mode<synchronous>, transform_indices = @transform_15, window_bounds = array<i64: 16, 112>}, {pipeline_mode = #tpu.pipeline_mode<synchronous>, transform_indices = @transform_16, window_bounds = array<i64: 16, 1>}, {pipeline_mode = #tpu.pipeline_mode<synchronous>, transform_indices = @transform_17, window_bounds = array<i64: 48, 16>}, {pipeline_mode = #tpu.pipeline_mode<synchronous>, transform_indices = @transform_18, window_bounds = array<i64: 48, 1>}, {transform_indices = @transform_19, window_bounds = array<i64: 1, 2, 8, 8>}, {transform_indices = @transform_20, window_bounds = array<i64: 1, 32, 8>}]} {
    %c0 = arith.constant 0 : index
    %c0_0 = arith.constant 0 : index
    %c0_1 = arith.constant 0 : index
    %0 = vector.load %arg1[%c0, %c0_0, %c0_1] : memref<1x1x64xf32, #tpu.memory_space<vmem>>, vector<1x1x64xf32>
    %1 = vector.shape_cast %0 : vector<1x1x64xf32> to vector<1x64xf32>
    %c0_2 = arith.constant 0 : index
    %c3 = arith.constant 3 : index
    %2 = vector.load %arg22[%c0_2, %c3] : memref<1x70xf32, #tpu.memory_space<vmem>>, vector<1x64xf32>
    tpu.vector_store %arg22[%c0_2, %c3], %1 {strides = array<i32>} : memref<1x70xf32, #tpu.memory_space<vmem>>, vector<1x64xf32>,
    %3 = vector.extract_strided_slice %1 {offsets = [0, 3], sizes = [1, 1], strides = [1, 1]} : vector<1x64xf32> to vector<1x1xf32>
    %c0_3 = arith.constant 0 : index
    %c0_4 = arith.constant 0 : index
    %4 = vector.load %arg22[%c0_3, %c0_4] : memref<1x70xf32, #tpu.memory_space<vmem>>, vector<1x1xf32>
    tpu.vector_store %arg22[%c0_3, %c0_4], %3 {strides = array<i32>} : memref<1x70xf32, #tpu.memory_space<vmem>>, vector<1x1xf32>,
    %5 = vector.extract_strided_slice %1 {offsets = [0, 2], sizes = [1, 1], strides = [1, 1]} : vector<1x64xf32> to vector<1x1xf32>
    %c0_5 = arith.constant 0 : index
    %c1 = arith.constant 1 : index
    %6 = vector.load %arg22[%c0_5, %c1] : memref<1x70xf32, #tpu.memory_space<vmem>>, vector<1x1xf32>
    tpu.vector_store %arg22[%c0_5, %c1], %5 {strides = array<i32>} : memref<1x70xf32, #tpu.memory_space<vmem>>, vector<1x1xf32>,
    %7 = vector.extract_strided_slice %1 {offsets = [0, 1], sizes = [1, 1], strides = [1, 1]} : vector<1x64xf32> to vector<1x1xf32>
    %c0_6 = arith.constant 0 : index
    %c2 = arith.constant 2 : index
    %8 = vector.load %arg22[%c0_6, %c2] : memref<1x70xf32, #tpu.memory_space<vmem>>, vector<1x1xf32>
    tpu.vector_store %arg22[%c0_6, %c2], %7 {strides = array<i32>} : memref<1x70xf32, #tpu.memory_space<vmem>>, vector<1x1xf32>,
    %9 = vector.extract_strided_slice %1 {offsets = [0, 62], sizes = [1, 1], strides = [1, 1]} : vector<1x64xf32> to vector<1x1xf32>
    %c0_7 = arith.constant 0 : index
    %c67 = arith.constant 67 : index
    %10 = vector.load %arg22[%c0_7, %c67] : memref<1x70xf32, #tpu.memory_space<vmem>>, vector<1x1xf32>
    tpu.vector_store %arg22[%c0_7, %c67], %9 {strides = array<i32>} : memref<1x70xf32, #tpu.memory_space<vmem>>, vector<1x1xf32>,
    %11 = vector.extract_strided_slice %1 {offsets = [0, 61], sizes = [1, 1], strides = [1, 1]} : vector<1x64xf32> to vector<1x1xf32>
    %c0_8 = arith.constant 0 : index
    %c68 = arith.constant 68 : index
    %12 = vector.load %arg22[%c0_8, %c68] : memref<1x70xf32, #tpu.memory_space<vmem>>, vector<1x1xf32>
    tpu.vector_store %arg22[%c0_8, %c68], %11 {strides = array<i32>} : memref<1x70xf32, #tpu.memory_space<vmem>>, vector<1x1xf32>,
    %13 = vector.extract_strided_slice %1 {offsets = [0, 60], sizes = [1, 1], strides = [1, 1]} : vector<1x64xf32> to vector<1x1xf32>
    %c0_9 = arith.constant 0 : index
    %c69 = arith.constant 69 : index
    %14 = vector.load %arg22[%c0_9, %c69] : memref<1x70xf32, #tpu.memory_space<vmem>>, vector<1x1xf32>
    tpu.vector_store %arg22[%c0_9, %c69], %13 {strides = array<i32>} : memref<1x70xf32, #tpu.memory_space<vmem>>, vector<1x1xf32>,
    %c0_10 = arith.constant 0 : index
    %c0_11 = arith.constant 0 : index
    %15 = vector.load %arg22[%c0_10, %c0_11] : memref<1x70xf32, #tpu.memory_space<vmem>>, vector<1x64xf32>
    %c0_12 = arith.constant 0 : index
    %c0_13 = arith.constant 0 : index
    %16 = vector.load %arg23[%c0_12, %c0_13] : memref<7x64xf32, #tpu.memory_space<vmem>>, vector<1x64xf32>
    tpu.vector_store %arg23[%c0_12, %c0_13], %15 {strides = array<i32>} : memref<7x64xf32, #tpu.memory_space<vmem>>, vector<1x64xf32>,
    %c0_14 = arith.constant 0 : index
    %c1_15 = arith.constant 1 : index
    %17 = vector.load %arg22[%c0_14, %c1_15] : memref<1x70xf32, #tpu.memory_space<vmem>>, vector<1x64xf32>
    %c1_16 = arith.constant 1 : index
    %c0_17 = arith.constant 0 : index
    %18 = vector.load %arg23[%c1_16, %c0_17] : memref<7x64xf32, #tpu.memory_space<vmem>>, vector<1x64xf32>
    tpu.vector_store %arg23[%c1_16, %c0_17], %17 {strides = array<i32>} : memref<7x64xf32, #tpu.memory_space<vmem>>, vector<1x64xf32>,
    %c0_18 = arith.constant 0 : index
    %c2_19 = arith.constant 2 : index
    %19 = vector.load %arg22[%c0_18, %c2_19] : memref<1x70xf32, #tpu.memory_space<vmem>>, vector<1x64xf32>
    %c2_20 = arith.constant 2 : index
    %c0_21 = arith.constant 0 : index
    %20 = vector.load %arg23[%c2_20, %c0_21] : memref<7x64xf32, #tpu.memory_space<vmem>>, vector<1x64xf32>
    tpu.vector_store %arg23[%c2_20, %c0_21], %19 {strides = array<i32>} : memref<7x64xf32, #tpu.memory_space<vmem>>, vector<1x64xf32>,
    %c0_22 = arith.constant 0 : index
    %c3_23 = arith.constant 3 : index
    %21 = vector.load %arg22[%c0_22, %c3_23] : memref<1x70xf32, #tpu.memory_space<vmem>>, vector<1x64xf32>
    %c3_24 = arith.constant 3 : index
    %c0_25 = arith.constant 0 : index
    %22 = vector.load %arg23[%c3_24, %c0_25] : memref<7x64xf32, #tpu.memory_space<vmem>>, vector<1x64xf32>
    tpu.vector_store %arg23[%c3_24, %c0_25], %21 {strides = array<i32>} : memref<7x64xf32, #tpu.memory_space<vmem>>, vector<1x64xf32>,
    %c0_26 = arith.constant 0 : index
    %c4 = arith.constant 4 : index
    %23 = vector.load %arg22[%c0_26, %c4] : memref<1x70xf32, #tpu.memory_space<vmem>>, vector<1x64xf32>
    %c4_27 = arith.constant 4 : index
    %c0_28 = arith.constant 0 : index
    %24 = vector.load %arg23[%c4_27, %c0_28] : memref<7x64xf32, #tpu.memory_space<vmem>>, vector<1x64xf32>
    tpu.vector_store %arg23[%c4_27, %c0_28], %23 {strides = array<i32>} : memref<7x64xf32, #tpu.memory_space<vmem>>, vector<1x64xf32>,
    %c0_29 = arith.constant 0 : index
    %c5 = arith.constant 5 : index
    %25 = vector.load %arg22[%c0_29, %c5] : memref<1x70xf32, #tpu.memory_space<vmem>>, vector<1x64xf32>
    %c5_30 = arith.constant 5 : index
    %c0_31 = arith.constant 0 : index
    %26 = vector.load %arg23[%c5_30, %c0_31] : memref<7x64xf32, #tpu.memory_space<vmem>>, vector<1x64xf32>
    tpu.vector_store %arg23[%c5_30, %c0_31], %25 {strides = array<i32>} : memref<7x64xf32, #tpu.memory_space<vmem>>, vector<1x64xf32>,
    %c0_32 = arith.constant 0 : index
    %c6 = arith.constant 6 : index
    %27 = vector.load %arg22[%c0_32, %c6] : memref<1x70xf32, #tpu.memory_space<vmem>>, vector<1x64xf32>
    %c6_33 = arith.constant 6 : index
    %c0_34 = arith.constant 0 : index
    %28 = vector.load %arg23[%c6_33, %c0_34] : memref<7x64xf32, #tpu.memory_space<vmem>>, vector<1x64xf32>
    tpu.vector_store %arg23[%c6_33, %c0_34], %27 {strides = array<i32>} : memref<7x64xf32, #tpu.memory_space<vmem>>, vector<1x64xf32>,
    %c0_35 = arith.constant 0 : index
    %c0_36 = arith.constant 0 : index
    %29 = vector.load %arg2[%c0_35, %c0_36] : memref<4x7xbf16, #tpu.memory_space<vmem>>, vector<4x7xbf16>
    %c0_37 = arith.constant 0 : index
    %c0_38 = arith.constant 0 : index
    %30 = vector.load %arg23[%c0_37, %c0_38] : memref<7x64xf32, #tpu.memory_space<vmem>>, vector<7x64xf32>
    %31 = arith.truncf %30 : vector<7x64xf32> to vector<7x64xbf16>
    %cst = arith.constant dense<0.000000e+00> : vector<4x64xf32>
    %32 = tpu.matmul %29, %31, %cst {dimension_numbers = #tpu.dot_dimension_numbers<[1], [0], [0], [1], [0, 0, 1, 1], [], []>} : vector<4x7xbf16>, vector<7x64xbf16>, vector<4x64xf32> -> vector<4x64xf32>
    %c0_39 = arith.constant 0 : index
    %c0_40 = arith.constant 0 : index
    %33 = vector.load %arg3[%c0_39, %c0_40] : memref<4x1xf32, #tpu.memory_space<vmem>>, vector<4x1xf32>
    %34 = vector.broadcast %33 : vector<4x1xf32> to vector<4x64xf32>
    %35 = arith.addf %32, %34 : vector<4x64xf32>
    %cst_41 = arith.constant 0.000000e+00 : f32
    %36 = vector.broadcast %cst_41 : f32 to vector<4x64xf32>
    %37 = arith.cmpf ogt, %35, %36 : vector<4x64xf32>
    %cst_42 = arith.constant 0.000000e+00 : f32
    %38 = vector.broadcast %cst_42 : f32 to vector<4x64xf32>
    %39 = arith.minimumf %35, %38 : vector<4x64xf32>
    %40 = math.exp %39 : vector<4x64xf32>
    %cst_43 = arith.constant 1.000000e+00 : f32
    %41 = vector.broadcast %cst_43 : f32 to vector<4x64xf32>
    %42 = arith.subf %40, %41 : vector<4x64xf32>
    %43 = arith.select %37, %35, %42 : vector<4x64xi1>, vector<4x64xf32>
    %c0_44 = arith.constant 0 : index
    %c1_45 = arith.constant 1 : index
    %44 = vector.load %arg24[%c0_44, %c1_45] : memref<4x66xf32, #tpu.memory_space<vmem>>, vector<4x64xf32>
    tpu.vector_store %arg24[%c0_44, %c1_45], %43 {strides = array<i32>} : memref<4x66xf32, #tpu.memory_space<vmem>>, vector<4x64xf32>,
    %45 = vector.extract_strided_slice %43 {offsets = [0, 1], sizes = [4, 1], strides = [1, 1]} : vector<4x64xf32> to vector<4x1xf32>
    %c0_46 = arith.constant 0 : index
    %c0_47 = arith.constant 0 : index
    %46 = vector.load %arg24[%c0_46, %c0_47] : memref<4x66xf32, #tpu.memory_space<vmem>>, vector<4x1xf32>
    tpu.vector_store %arg24[%c0_46, %c0_47], %45 {strides = array<i32>} : memref<4x66xf32, #tpu.memory_space<vmem>>, vector<4x1xf32>,
    %47 = vector.extract_strided_slice %43 {offsets = [0, 62], sizes = [4, 1], strides = [1, 1]} : vector<4x64xf32> to vector<4x1xf32>
    %c0_48 = arith.constant 0 : index
    %c65 = arith.constant 65 : index
    %48 = vector.load %arg24[%c0_48, %c65] : memref<4x66xf32, #tpu.memory_space<vmem>>, vector<4x1xf32>
    tpu.vector_store %arg24[%c0_48, %c65], %47 {strides = array<i32>} : memref<4x66xf32, #tpu.memory_space<vmem>>, vector<4x1xf32>,
    %c0_49 = arith.constant 0 : index
    %c0_50 = arith.constant 0 : index
    %49 = vector.load %arg24[%c0_49, %c0_50] : memref<4x66xf32, #tpu.memory_space<vmem>>, vector<4x64xf32>
    %c0_51 = arith.constant 0 : index
    %c0_52 = arith.constant 0 : index
    %50 = vector.load %arg25[%c0_51, %c0_52] : memref<12x64xf32, #tpu.memory_space<vmem>>, vector<4x64xf32>
    tpu.vector_store %arg25[%c0_51, %c0_52], %49 {strides = array<i32>} : memref<12x64xf32, #tpu.memory_space<vmem>>, vector<4x64xf32>,
    %c0_53 = arith.constant 0 : index
    %c1_54 = arith.constant 1 : index
    %51 = vector.load %arg24[%c0_53, %c1_54] : memref<4x66xf32, #tpu.memory_space<vmem>>, vector<4x64xf32>
    %c4_55 = arith.constant 4 : index
    %c0_56 = arith.constant 0 : index
    %52 = vector.load %arg25[%c4_55, %c0_56] : memref<12x64xf32, #tpu.memory_space<vmem>>, vector<4x64xf32>
    tpu.vector_store %arg25[%c4_55, %c0_56], %51 {strides = array<i32>} : memref<12x64xf32, #tpu.memory_space<vmem>>, vector<4x64xf32>,
    %c0_57 = arith.constant 0 : index
    %c2_58 = arith.constant 2 : index
    %53 = vector.load %arg24[%c0_57, %c2_58] : memref<4x66xf32, #tpu.memory_space<vmem>>, vector<4x64xf32>
    %c8 = arith.constant 8 : index
    %c0_59 = arith.constant 0 : index
    %54 = vector.load %arg25[%c8, %c0_59] : memref<12x64xf32, #tpu.memory_space<vmem>>, vector<4x64xf32>
    tpu.vector_store %arg25[%c8, %c0_59], %53 {strides = array<i32>} : memref<12x64xf32, #tpu.memory_space<vmem>>, vector<4x64xf32>,
    %c0_60 = arith.constant 0 : index
    %c0_61 = arith.constant 0 : index
    %55 = vector.load %arg4[%c0_60, %c0_61] : memref<2x12xbf16, #tpu.memory_space<vmem>>, vector<2x12xbf16>
    %c0_62 = arith.constant 0 : index
    %c0_63 = arith.constant 0 : index
    %56 = vector.load %arg25[%c0_62, %c0_63] : memref<12x64xf32, #tpu.memory_space<vmem>>, vector<12x64xf32>
    %57 = arith.truncf %56 : vector<12x64xf32> to vector<12x64xbf16>
    %cst_64 = arith.constant dense<0.000000e+00> : vector<2x64xf32>
    %58 = tpu.matmul %55, %57, %cst_64 {dimension_numbers = #tpu.dot_dimension_numbers<[1], [0], [0], [1], [0, 0, 1, 1], [], []>} : vector<2x12xbf16>, vector<12x64xbf16>, vector<2x64xf32> -> vector<2x64xf32>
    %c0_65 = arith.constant 0 : index
    %c0_66 = arith.constant 0 : index
    %59 = vector.load %arg5[%c0_65, %c0_66] : memref<2x1xf32, #tpu.memory_space<vmem>>, vector<2x1xf32>
    %60 = vector.broadcast %59 : vector<2x1xf32> to vector<2x64xf32>
    %61 = arith.addf %58, %60 : vector<2x64xf32>
    %cst_67 = arith.constant 0.000000e+00 : f32
    %62 = vector.broadcast %cst_67 : f32 to vector<2x64xf32>
    %63 = arith.cmpf ogt, %61, %62 : vector<2x64xf32>
    %cst_68 = arith.constant 0.000000e+00 : f32
    %64 = vector.broadcast %cst_68 : f32 to vector<2x64xf32>
    %65 = arith.minimumf %61, %64 : vector<2x64xf32>
    %66 = math.exp %65 : vector<2x64xf32>
    %cst_69 = arith.constant 1.000000e+00 : f32
    %67 = vector.broadcast %cst_69 : f32 to vector<2x64xf32>
    %68 = arith.subf %66, %67 : vector<2x64xf32>
    %69 = arith.select %63, %61, %68 : vector<2x64xi1>, vector<2x64xf32>
    %c0_70 = arith.constant 0 : index
    %c0_71 = arith.constant 0 : index
    %70 = vector.load %arg6[%c0_70, %c0_71] : memref<4x2xbf16, #tpu.memory_space<vmem>>, vector<4x2xbf16>
    %71 = arith.truncf %69 : vector<2x64xf32> to vector<2x64xbf16>
    %cst_72 = arith.constant dense<0.000000e+00> : vector<4x64xf32>
    %72 = tpu.matmul %70, %71, %cst_72 {dimension_numbers = #tpu.dot_dimension_numbers<[1], [0], [0], [1], [0, 0, 1, 1], [], []>} : vector<4x2xbf16>, vector<2x64xbf16>, vector<4x64xf32> -> vector<4x64xf32>
    %c0_73 = arith.constant 0 : index
    %c0_74 = arith.constant 0 : index
    %73 = vector.load %arg7[%c0_73, %c0_74] : memref<4x1xf32, #tpu.memory_space<vmem>>, vector<4x1xf32>
    %74 = vector.broadcast %73 : vector<4x1xf32> to vector<4x64xf32>
    %75 = arith.addf %72, %74 : vector<4x64xf32>
    %76 = arith.addf %75, %35 : vector<4x64xf32>
    %cst_75 = arith.constant 0.000000e+00 : f32
    %77 = vector.broadcast %cst_75 : f32 to vector<4x64xf32>
    %78 = arith.cmpf ogt, %76, %77 : vector<4x64xf32>
    %cst_76 = arith.constant 0.000000e+00 : f32
    %79 = vector.broadcast %cst_76 : f32 to vector<4x64xf32>
    %80 = arith.minimumf %76, %79 : vector<4x64xf32>
    %81 = math.exp %80 : vector<4x64xf32>
    %cst_77 = arith.constant 1.000000e+00 : f32
    %82 = vector.broadcast %cst_77 : f32 to vector<4x64xf32>
    %83 = arith.subf %81, %82 : vector<4x64xf32>
    %84 = arith.select %78, %76, %83 : vector<4x64xi1>, vector<4x64xf32>
    %c0_78 = arith.constant 0 : index
    %c1_79 = arith.constant 1 : index
    %85 = vector.load %arg26[%c0_78, %c1_79] : memref<4x66xf32, #tpu.memory_space<vmem>>, vector<4x64xf32>
    tpu.vector_store %arg26[%c0_78, %c1_79], %84 {strides = array<i32>} : memref<4x66xf32, #tpu.memory_space<vmem>>, vector<4x64xf32>,
    %86 = vector.extract_strided_slice %84 {offsets = [0, 1], sizes = [4, 1], strides = [1, 1]} : vector<4x64xf32> to vector<4x1xf32>
    %c0_80 = arith.constant 0 : index
    %c0_81 = arith.constant 0 : index
    %87 = vector.load %arg26[%c0_80, %c0_81] : memref<4x66xf32, #tpu.memory_space<vmem>>, vector<4x1xf32>
    tpu.vector_store %arg26[%c0_80, %c0_81], %86 {strides = array<i32>} : memref<4x66xf32, #tpu.memory_space<vmem>>, vector<4x1xf32>,
    %88 = vector.extract_strided_slice %84 {offsets = [0, 62], sizes = [4, 1], strides = [1, 1]} : vector<4x64xf32> to vector<4x1xf32>
    %c0_82 = arith.constant 0 : index
    %c65_83 = arith.constant 65 : index
    %89 = vector.load %arg26[%c0_82, %c65_83] : memref<4x66xf32, #tpu.memory_space<vmem>>, vector<4x1xf32>
    tpu.vector_store %arg26[%c0_82, %c65_83], %88 {strides = array<i32>} : memref<4x66xf32, #tpu.memory_space<vmem>>, vector<4x1xf32>,
    %c0_84 = arith.constant 0 : index
    %c0_85 = arith.constant 0 : index
    %90 = vector.load %arg26[%c0_84, %c0_85] : memref<4x66xf32, #tpu.memory_space<vmem>>, vector<4x63xf32>
    %c0_86 = arith.constant 0 : index
    %c0_87 = arith.constant 0 : index
    %91 = vector.load %arg8[%c0_86, %c0_87] : memref<8x16xbf16, #tpu.memory_space<vmem>>, vector<8x4xbf16>
    %92 = arith.truncf %90 : vector<4x63xf32> to vector<4x63xbf16>
    %cst_88 = arith.constant dense<0.000000e+00> : vector<8x63xf32>
    %93 = tpu.matmul %91, %92, %cst_88 {dimension_numbers = #tpu.dot_dimension_numbers<[1], [0], [0], [1], [0, 0, 1, 1], [], []>} : vector<8x4xbf16>, vector<4x63xbf16>, vector<8x63xf32> -> vector<8x63xf32>
    %c0_89 = arith.constant 0 : index
    %c1_90 = arith.constant 1 : index
    %94 = vector.load %arg26[%c0_89, %c1_90] : memref<4x66xf32, #tpu.memory_space<vmem>>, vector<4x63xf32>
    %c0_91 = arith.constant 0 : index
    %c4_92 = arith.constant 4 : index
    %95 = vector.load %arg8[%c0_91, %c4_92] : memref<8x16xbf16, #tpu.memory_space<vmem>>, vector<8x4xbf16>
    %96 = arith.truncf %94 : vector<4x63xf32> to vector<4x63xbf16>
    %cst_93 = arith.constant dense<0.000000e+00> : vector<8x63xf32>
    %97 = tpu.matmul %95, %96, %cst_93 {dimension_numbers = #tpu.dot_dimension_numbers<[1], [0], [0], [1], [0, 0, 1, 1], [], []>} : vector<8x4xbf16>, vector<4x63xbf16>, vector<8x63xf32> -> vector<8x63xf32>
    %98 = arith.addf %93, %97 : vector<8x63xf32>
    %c0_94 = arith.constant 0 : index
    %c2_95 = arith.constant 2 : index
    %99 = vector.load %arg26[%c0_94, %c2_95] : memref<4x66xf32, #tpu.memory_space<vmem>>, vector<4x63xf32>
    %c0_96 = arith.constant 0 : index
    %c8_97 = arith.constant 8 : index
    %100 = vector.load %arg8[%c0_96, %c8_97] : memref<8x16xbf16, #tpu.memory_space<vmem>>, vector<8x4xbf16>
    %101 = arith.truncf %99 : vector<4x63xf32> to vector<4x63xbf16>
    %cst_98 = arith.constant dense<0.000000e+00> : vector<8x63xf32>
    %102 = tpu.matmul %100, %101, %cst_98 {dimension_numbers = #tpu.dot_dimension_numbers<[1], [0], [0], [1], [0, 0, 1, 1], [], []>} : vector<8x4xbf16>, vector<4x63xbf16>, vector<8x63xf32> -> vector<8x63xf32>
    %103 = arith.addf %98, %102 : vector<8x63xf32>
    %c0_99 = arith.constant 0 : index
    %c3_100 = arith.constant 3 : index
    %104 = vector.load %arg26[%c0_99, %c3_100] : memref<4x66xf32, #tpu.memory_space<vmem>>, vector<4x63xf32>
    %c0_101 = arith.constant 0 : index
    %c12 = arith.constant 12 : index
    %105 = vector.load %arg8[%c0_101, %c12] : memref<8x16xbf16, #tpu.memory_space<vmem>>, vector<8x4xbf16>
    %106 = arith.truncf %104 : vector<4x63xf32> to vector<4x63xbf16>
    %cst_102 = arith.constant dense<0.000000e+00> : vector<8x63xf32>
    %107 = tpu.matmul %105, %106, %cst_102 {dimension_numbers = #tpu.dot_dimension_numbers<[1], [0], [0], [1], [0, 0, 1, 1], [], []>} : vector<8x4xbf16>, vector<4x63xbf16>, vector<8x63xf32> -> vector<8x63xf32>
    %108 = arith.addf %103, %107 : vector<8x63xf32>
    %109 = arith.truncf %108 : vector<8x63xf32> to vector<8x63xbf16>
    %110 = tpu.iota {dimensions = array<i32: 0>} : vector<63x32xi32>
    %111 = tpu.iota {dimensions = array<i32: 1>} : vector<63x32xi32>
    %c2_i32 = arith.constant 2 : i32
    %112 = vector.broadcast %c2_i32 : i32 to vector<63x32xi32>
    %113 = arith.muli %112, %111 : vector<63x32xi32>
    %114 = arith.cmpi eq, %110, %113 : vector<63x32xi32>
    %115 = arith.extui %114 : vector<63x32xi1> to vector<63x32xi32>
    %116 = arith.sitofp %115 : vector<63x32xi32> to vector<63x32xf32>
    %117 = arith.truncf %116 : vector<63x32xf32> to vector<63x32xbf16>
    %cst_103 = arith.constant dense<0.000000e+00> : vector<8x32xf32>
    %118 = tpu.matmul %109, %117, %cst_103 {dimension_numbers = #tpu.dot_dimension_numbers<[1], [0], [0], [1], [0, 0, 1, 1], [], []>} : vector<8x63xbf16>, vector<63x32xbf16>, vector<8x32xf32> -> vector<8x32xf32>
    %c0_104 = arith.constant 0 : index
    %c0_105 = arith.constant 0 : index
    %119 = vector.load %arg9[%c0_104, %c0_105] : memref<8x1xf32, #tpu.memory_space<vmem>>, vector<8x1xf32>
    %120 = vector.broadcast %119 : vector<8x1xf32> to vector<8x32xf32>
    %121 = arith.addf %118, %120 : vector<8x32xf32>
    %c0_106 = arith.constant 0 : index
    %c0_107 = arith.constant 0 : index
    %122 = vector.load %arg27[%c0_106, %c0_107] : memref<8x32xf32, #tpu.memory_space<vmem>>, vector<8x32xf32>
    tpu.vector_store %arg27[%c0_106, %c0_107], %121 {strides = array<i32>} : memref<8x32xf32, #tpu.memory_space<vmem>>, vector<8x32xf32>,
    %c0_108 = arith.constant 0 : index
    %c0_109 = arith.constant 0 : index
    %123 = vector.load %arg27[%c0_108, %c0_109] : memref<8x32xf32, #tpu.memory_space<vmem>>, vector<8x32xf32>
    %cst_110 = arith.constant 0.000000e+00 : f32
    %124 = vector.broadcast %cst_110 : f32 to vector<8x32xf32>
    %125 = arith.cmpf ogt, %123, %124 : vector<8x32xf32>
    %cst_111 = arith.constant 0.000000e+00 : f32
    %126 = vector.broadcast %cst_111 : f32 to vector<8x32xf32>
    %127 = arith.minimumf %123, %126 : vector<8x32xf32>
    %128 = math.exp %127 : vector<8x32xf32>
    %cst_112 = arith.constant 1.000000e+00 : f32
    %129 = vector.broadcast %cst_112 : f32 to vector<8x32xf32>
    %130 = arith.subf %128, %129 : vector<8x32xf32>
    %131 = arith.select %125, %123, %130 : vector<8x32xi1>, vector<8x32xf32>
    %c0_113 = arith.constant 0 : index
    %c1_114 = arith.constant 1 : index
    %132 = vector.load %arg28[%c0_113, %c1_114] : memref<8x34xf32, #tpu.memory_space<vmem>>, vector<8x32xf32>
    tpu.vector_store %arg28[%c0_113, %c1_114], %131 {strides = array<i32>} : memref<8x34xf32, #tpu.memory_space<vmem>>, vector<8x32xf32>,
    %133 = vector.extract_strided_slice %131 {offsets = [0, 1], sizes = [8, 1], strides = [1, 1]} : vector<8x32xf32> to vector<8x1xf32>
    %c0_115 = arith.constant 0 : index
    %c0_116 = arith.constant 0 : index
    %134 = vector.load %arg28[%c0_115, %c0_116] : memref<8x34xf32, #tpu.memory_space<vmem>>, vector<8x1xf32>
    tpu.vector_store %arg28[%c0_115, %c0_116], %133 {strides = array<i32>} : memref<8x34xf32, #tpu.memory_space<vmem>>, vector<8x1xf32>,
    %135 = vector.extract_strided_slice %131 {offsets = [0, 30], sizes = [8, 1], strides = [1, 1]} : vector<8x32xf32> to vector<8x1xf32>
    %c0_117 = arith.constant 0 : index
    %c33 = arith.constant 33 : index
    %136 = vector.load %arg28[%c0_117, %c33] : memref<8x34xf32, #tpu.memory_space<vmem>>, vector<8x1xf32>
    tpu.vector_store %arg28[%c0_117, %c33], %135 {strides = array<i32>} : memref<8x34xf32, #tpu.memory_space<vmem>>, vector<8x1xf32>,
    %c0_118 = arith.constant 0 : index
    %c0_119 = arith.constant 0 : index
    %137 = vector.load %arg28[%c0_118, %c0_119] : memref<8x34xf32, #tpu.memory_space<vmem>>, vector<8x32xf32>
    %c0_120 = arith.constant 0 : index
    %c0_121 = arith.constant 0 : index
    %138 = vector.load %arg29[%c0_120, %c0_121] : memref<24x32xf32, #tpu.memory_space<vmem>>, vector<8x32xf32>
    tpu.vector_store %arg29[%c0_120, %c0_121], %137 {strides = array<i32>} : memref<24x32xf32, #tpu.memory_space<vmem>>, vector<8x32xf32>,
    %c0_122 = arith.constant 0 : index
    %c1_123 = arith.constant 1 : index
    %139 = vector.load %arg28[%c0_122, %c1_123] : memref<8x34xf32, #tpu.memory_space<vmem>>, vector<8x32xf32>
    %c8_124 = arith.constant 8 : index
    %c0_125 = arith.constant 0 : index
    %140 = vector.load %arg29[%c8_124, %c0_125] : memref<24x32xf32, #tpu.memory_space<vmem>>, vector<8x32xf32>
    tpu.vector_store %arg29[%c8_124, %c0_125], %139 {strides = array<i32>} : memref<24x32xf32, #tpu.memory_space<vmem>>, vector<8x32xf32>,
    %c0_126 = arith.constant 0 : index
    %c2_127 = arith.constant 2 : index
    %141 = vector.load %arg28[%c0_126, %c2_127] : memref<8x34xf32, #tpu.memory_space<vmem>>, vector<8x32xf32>
    %c16 = arith.constant 16 : index
    %c0_128 = arith.constant 0 : index
    %142 = vector.load %arg29[%c16, %c0_128] : memref<24x32xf32, #tpu.memory_space<vmem>>, vector<8x32xf32>
    tpu.vector_store %arg29[%c16, %c0_128], %141 {strides = array<i32>} : memref<24x32xf32, #tpu.memory_space<vmem>>, vector<8x32xf32>,
    %c0_129 = arith.constant 0 : index
    %c0_130 = arith.constant 0 : index
    %143 = vector.load %arg10[%c0_129, %c0_130] : memref<4x24xbf16, #tpu.memory_space<vmem>>, vector<4x24xbf16>
    %c0_131 = arith.constant 0 : index
    %c0_132 = arith.constant 0 : index
    %144 = vector.load %arg29[%c0_131, %c0_132] : memref<24x32xf32, #tpu.memory_space<vmem>>, vector<24x32xf32>
    %145 = arith.truncf %144 : vector<24x32xf32> to vector<24x32xbf16>
    %cst_133 = arith.constant dense<0.000000e+00> : vector<4x32xf32>
    %146 = tpu.matmul %143, %145, %cst_133 {dimension_numbers = #tpu.dot_dimension_numbers<[1], [0], [0], [1], [0, 0, 1, 1], [], []>} : vector<4x24xbf16>, vector<24x32xbf16>, vector<4x32xf32> -> vector<4x32xf32>
    %c0_134 = arith.constant 0 : index
    %c0_135 = arith.constant 0 : index
    %147 = vector.load %arg11[%c0_134, %c0_135] : memref<4x1xf32, #tpu.memory_space<vmem>>, vector<4x1xf32>
    %148 = vector.broadcast %147 : vector<4x1xf32> to vector<4x32xf32>
    %149 = arith.addf %146, %148 : vector<4x32xf32>
    %cst_136 = arith.constant 0.000000e+00 : f32
    %150 = vector.broadcast %cst_136 : f32 to vector<4x32xf32>
    %151 = arith.cmpf ogt, %149, %150 : vector<4x32xf32>
    %cst_137 = arith.constant 0.000000e+00 : f32
    %152 = vector.broadcast %cst_137 : f32 to vector<4x32xf32>
    %153 = arith.minimumf %149, %152 : vector<4x32xf32>
    %154 = math.exp %153 : vector<4x32xf32>
    %cst_138 = arith.constant 1.000000e+00 : f32
    %155 = vector.broadcast %cst_138 : f32 to vector<4x32xf32>
    %156 = arith.subf %154, %155 : vector<4x32xf32>
    %157 = arith.select %151, %149, %156 : vector<4x32xi1>, vector<4x32xf32>
    %c0_139 = arith.constant 0 : index
    %c0_140 = arith.constant 0 : index
    %158 = vector.load %arg12[%c0_139, %c0_140] : memref<8x4xbf16, #tpu.memory_space<vmem>>, vector<8x4xbf16>
    %159 = arith.truncf %157 : vector<4x32xf32> to vector<4x32xbf16>
    %cst_141 = arith.constant dense<0.000000e+00> : vector<8x32xf32>
    %160 = tpu.matmul %158, %159, %cst_141 {dimension_numbers = #tpu.dot_dimension_numbers<[1], [0], [0], [1], [0, 0, 1, 1], [], []>} : vector<8x4xbf16>, vector<4x32xbf16>, vector<8x32xf32> -> vector<8x32xf32>
    %c0_142 = arith.constant 0 : index
    %c0_143 = arith.constant 0 : index
    %161 = vector.load %arg13[%c0_142, %c0_143] : memref<8x1xf32, #tpu.memory_space<vmem>>, vector<8x1xf32>
    %162 = vector.broadcast %161 : vector<8x1xf32> to vector<8x32xf32>
    %163 = arith.addf %160, %162 : vector<8x32xf32>
    %164 = arith.addf %163, %123 : vector<8x32xf32>
    %cst_144 = arith.constant 0.000000e+00 : f32
    %165 = vector.broadcast %cst_144 : f32 to vector<8x32xf32>
    %166 = arith.cmpf ogt, %164, %165 : vector<8x32xf32>
    %cst_145 = arith.constant 0.000000e+00 : f32
    %167 = vector.broadcast %cst_145 : f32 to vector<8x32xf32>
    %168 = arith.minimumf %164, %167 : vector<8x32xf32>
    %169 = math.exp %168 : vector<8x32xf32>
    %cst_146 = arith.constant 1.000000e+00 : f32
    %170 = vector.broadcast %cst_146 : f32 to vector<8x32xf32>
    %171 = arith.subf %169, %170 : vector<8x32xf32>
    %172 = arith.select %166, %164, %171 : vector<8x32xi1>, vector<8x32xf32>
    %c0_147 = arith.constant 0 : index
    %c2_148 = arith.constant 2 : index
    %173 = vector.load %arg30[%c0_147, %c2_148] : memref<8x36xf32, #tpu.memory_space<vmem>>, vector<8x32xf32>
    tpu.vector_store %arg30[%c0_147, %c2_148], %172 {strides = array<i32>} : memref<8x36xf32, #tpu.memory_space<vmem>>, vector<8x32xf32>,
    %174 = vector.extract_strided_slice %172 {offsets = [0, 2], sizes = [8, 1], strides = [1, 1]} : vector<8x32xf32> to vector<8x1xf32>
    %c0_149 = arith.constant 0 : index
    %c0_150 = arith.constant 0 : index
    %175 = vector.load %arg30[%c0_149, %c0_150] : memref<8x36xf32, #tpu.memory_space<vmem>>, vector<8x1xf32>
    tpu.vector_store %arg30[%c0_149, %c0_150], %174 {strides = array<i32>} : memref<8x36xf32, #tpu.memory_space<vmem>>, vector<8x1xf32>,
    %176 = vector.extract_strided_slice %172 {offsets = [0, 1], sizes = [8, 1], strides = [1, 1]} : vector<8x32xf32> to vector<8x1xf32>
    %c0_151 = arith.constant 0 : index
    %c1_152 = arith.constant 1 : index
    %177 = vector.load %arg30[%c0_151, %c1_152] : memref<8x36xf32, #tpu.memory_space<vmem>>, vector<8x1xf32>
    tpu.vector_store %arg30[%c0_151, %c1_152], %176 {strides = array<i32>} : memref<8x36xf32, #tpu.memory_space<vmem>>, vector<8x1xf32>,
    %178 = vector.extract_strided_slice %172 {offsets = [0, 30], sizes = [8, 1], strides = [1, 1]} : vector<8x32xf32> to vector<8x1xf32>
    %c0_153 = arith.constant 0 : index
    %c34 = arith.constant 34 : index
    %179 = vector.load %arg30[%c0_153, %c34] : memref<8x36xf32, #tpu.memory_space<vmem>>, vector<8x1xf32>
    tpu.vector_store %arg30[%c0_153, %c34], %178 {strides = array<i32>} : memref<8x36xf32, #tpu.memory_space<vmem>>, vector<8x1xf32>,
    %180 = vector.extract_strided_slice %172 {offsets = [0, 29], sizes = [8, 1], strides = [1, 1]} : vector<8x32xf32> to vector<8x1xf32>
    %c0_154 = arith.constant 0 : index
    %c35 = arith.constant 35 : index
    %181 = vector.load %arg30[%c0_154, %c35] : memref<8x36xf32, #tpu.memory_space<vmem>>, vector<8x1xf32>
    tpu.vector_store %arg30[%c0_154, %c35], %180 {strides = array<i32>} : memref<8x36xf32, #tpu.memory_space<vmem>>, vector<8x1xf32>,
    %c0_155 = arith.constant 0 : index
    %c0_156 = arith.constant 0 : index
    %182 = vector.load %arg30[%c0_155, %c0_156] : memref<8x36xf32, #tpu.memory_space<vmem>>, vector<8x29xf32>
    %c0_157 = arith.constant 0 : index
    %c0_158 = arith.constant 0 : index
    %183 = vector.load %arg14[%c0_157, %c0_158] : memref<16x64xbf16, #tpu.memory_space<vmem>>, vector<16x8xbf16>
    %184 = arith.truncf %182 : vector<8x29xf32> to vector<8x29xbf16>
    %cst_159 = arith.constant dense<0.000000e+00> : vector<16x29xf32>
    %185 = tpu.matmul %183, %184, %cst_159 {dimension_numbers = #tpu.dot_dimension_numbers<[1], [0], [0], [1], [0, 0, 1, 1], [], []>} : vector<16x8xbf16>, vector<8x29xbf16>, vector<16x29xf32> -> vector<16x29xf32>
    %c0_160 = arith.constant 0 : index
    %c1_161 = arith.constant 1 : index
    %186 = vector.load %arg30[%c0_160, %c1_161] : memref<8x36xf32, #tpu.memory_space<vmem>>, vector<8x29xf32>
    %c0_162 = arith.constant 0 : index
    %c8_163 = arith.constant 8 : index
    %187 = vector.load %arg14[%c0_162, %c8_163] : memref<16x64xbf16, #tpu.memory_space<vmem>>, vector<16x8xbf16>
    %188 = arith.truncf %186 : vector<8x29xf32> to vector<8x29xbf16>
    %cst_164 = arith.constant dense<0.000000e+00> : vector<16x29xf32>
    %189 = tpu.matmul %187, %188, %cst_164 {dimension_numbers = #tpu.dot_dimension_numbers<[1], [0], [0], [1], [0, 0, 1, 1], [], []>} : vector<16x8xbf16>, vector<8x29xbf16>, vector<16x29xf32> -> vector<16x29xf32>
    %190 = arith.addf %185, %189 : vector<16x29xf32>
    %c0_165 = arith.constant 0 : index
    %c2_166 = arith.constant 2 : index
    %191 = vector.load %arg30[%c0_165, %c2_166] : memref<8x36xf32, #tpu.memory_space<vmem>>, vector<8x29xf32>
    %c0_167 = arith.constant 0 : index
    %c16_168 = arith.constant 16 : index
    %192 = vector.load %arg14[%c0_167, %c16_168] : memref<16x64xbf16, #tpu.memory_space<vmem>>, vector<16x8xbf16>
    %193 = arith.truncf %191 : vector<8x29xf32> to vector<8x29xbf16>
    %cst_169 = arith.constant dense<0.000000e+00> : vector<16x29xf32>
    %194 = tpu.matmul %192, %193, %cst_169 {dimension_numbers = #tpu.dot_dimension_numbers<[1], [0], [0], [1], [0, 0, 1, 1], [], []>} : vector<16x8xbf16>, vector<8x29xbf16>, vector<16x29xf32> -> vector<16x29xf32>
    %195 = arith.addf %190, %194 : vector<16x29xf32>
    %c0_170 = arith.constant 0 : index
    %c3_171 = arith.constant 3 : index
    %196 = vector.load %arg30[%c0_170, %c3_171] : memref<8x36xf32, #tpu.memory_space<vmem>>, vector<8x29xf32>
    %c0_172 = arith.constant 0 : index
    %c24 = arith.constant 24 : index
    %197 = vector.load %arg14[%c0_172, %c24] : memref<16x64xbf16, #tpu.memory_space<vmem>>, vector<16x8xbf16>
    %198 = arith.truncf %196 : vector<8x29xf32> to vector<8x29xbf16>
    %cst_173 = arith.constant dense<0.000000e+00> : vector<16x29xf32>
    %199 = tpu.matmul %197, %198, %cst_173 {dimension_numbers = #tpu.dot_dimension_numbers<[1], [0], [0], [1], [0, 0, 1, 1], [], []>} : vector<16x8xbf16>, vector<8x29xbf16>, vector<16x29xf32> -> vector<16x29xf32>
    %200 = arith.addf %195, %199 : vector<16x29xf32>
    %c0_174 = arith.constant 0 : index
    %c4_175 = arith.constant 4 : index
    %201 = vector.load %arg30[%c0_174, %c4_175] : memref<8x36xf32, #tpu.memory_space<vmem>>, vector<8x29xf32>
    %c0_176 = arith.constant 0 : index
    %c32 = arith.constant 32 : index
    %202 = vector.load %arg14[%c0_176, %c32] : memref<16x64xbf16, #tpu.memory_space<vmem>>, vector<16x8xbf16>
    %203 = arith.truncf %201 : vector<8x29xf32> to vector<8x29xbf16>
    %cst_177 = arith.constant dense<0.000000e+00> : vector<16x29xf32>
    %204 = tpu.matmul %202, %203, %cst_177 {dimension_numbers = #tpu.dot_dimension_numbers<[1], [0], [0], [1], [0, 0, 1, 1], [], []>} : vector<16x8xbf16>, vector<8x29xbf16>, vector<16x29xf32> -> vector<16x29xf32>
    %205 = arith.addf %200, %204 : vector<16x29xf32>
    %c0_178 = arith.constant 0 : index
    %c5_179 = arith.constant 5 : index
    %206 = vector.load %arg30[%c0_178, %c5_179] : memref<8x36xf32, #tpu.memory_space<vmem>>, vector<8x29xf32>
    %c0_180 = arith.constant 0 : index
    %c40 = arith.constant 40 : index
    %207 = vector.load %arg14[%c0_180, %c40] : memref<16x64xbf16, #tpu.memory_space<vmem>>, vector<16x8xbf16>
    %208 = arith.truncf %206 : vector<8x29xf32> to vector<8x29xbf16>
    %cst_181 = arith.constant dense<0.000000e+00> : vector<16x29xf32>
    %209 = tpu.matmul %207, %208, %cst_181 {dimension_numbers = #tpu.dot_dimension_numbers<[1], [0], [0], [1], [0, 0, 1, 1], [], []>} : vector<16x8xbf16>, vector<8x29xbf16>, vector<16x29xf32> -> vector<16x29xf32>
    %210 = arith.addf %205, %209 : vector<16x29xf32>
    %c0_182 = arith.constant 0 : index
    %c6_183 = arith.constant 6 : index
    %211 = vector.load %arg30[%c0_182, %c6_183] : memref<8x36xf32, #tpu.memory_space<vmem>>, vector<8x29xf32>
    %c0_184 = arith.constant 0 : index
    %c48 = arith.constant 48 : index
    %212 = vector.load %arg14[%c0_184, %c48] : memref<16x64xbf16, #tpu.memory_space<vmem>>, vector<16x8xbf16>
    %213 = arith.truncf %211 : vector<8x29xf32> to vector<8x29xbf16>
    %cst_185 = arith.constant dense<0.000000e+00> : vector<16x29xf32>
    %214 = tpu.matmul %212, %213, %cst_185 {dimension_numbers = #tpu.dot_dimension_numbers<[1], [0], [0], [1], [0, 0, 1, 1], [], []>} : vector<16x8xbf16>, vector<8x29xbf16>, vector<16x29xf32> -> vector<16x29xf32>
    %215 = arith.addf %210, %214 : vector<16x29xf32>
    %c0_186 = arith.constant 0 : index
    %c7 = arith.constant 7 : index
    %216 = vector.load %arg30[%c0_186, %c7] : memref<8x36xf32, #tpu.memory_space<vmem>>, vector<8x29xf32>
    %c0_187 = arith.constant 0 : index
    %c56 = arith.constant 56 : index
    %217 = vector.load %arg14[%c0_187, %c56] : memref<16x64xbf16, #tpu.memory_space<vmem>>, vector<16x8xbf16>
    %218 = arith.truncf %216 : vector<8x29xf32> to vector<8x29xbf16>
    %cst_188 = arith.constant dense<0.000000e+00> : vector<16x29xf32>
    %219 = tpu.matmul %217, %218, %cst_188 {dimension_numbers = #tpu.dot_dimension_numbers<[1], [0], [0], [1], [0, 0, 1, 1], [], []>} : vector<16x8xbf16>, vector<8x29xbf16>, vector<16x29xf32> -> vector<16x29xf32>
    %220 = arith.addf %215, %219 : vector<16x29xf32>
    %221 = arith.truncf %220 : vector<16x29xf32> to vector<16x29xbf16>
    %222 = tpu.iota {dimensions = array<i32: 0>} : vector<29x8xi32>
    %223 = tpu.iota {dimensions = array<i32: 1>} : vector<29x8xi32>
    %c4_i32 = arith.constant 4 : i32
    %224 = vector.broadcast %c4_i32 : i32 to vector<29x8xi32>
    %225 = arith.muli %224, %223 : vector<29x8xi32>
    %226 = arith.cmpi eq, %222, %225 : vector<29x8xi32>
    %227 = arith.extui %226 : vector<29x8xi1> to vector<29x8xi32>
    %228 = arith.sitofp %227 : vector<29x8xi32> to vector<29x8xf32>
    %229 = arith.truncf %228 : vector<29x8xf32> to vector<29x8xbf16>
    %cst_189 = arith.constant dense<0.000000e+00> : vector<16x8xf32>
    %230 = tpu.matmul %221, %229, %cst_189 {dimension_numbers = #tpu.dot_dimension_numbers<[1], [0], [0], [1], [0, 0, 1, 1], [], []>} : vector<16x29xbf16>, vector<29x8xbf16>, vector<16x8xf32> -> vector<16x8xf32>
    %c0_190 = arith.constant 0 : index
    %c0_191 = arith.constant 0 : index
    %231 = vector.load %arg15[%c0_190, %c0_191] : memref<16x1xf32, #tpu.memory_space<vmem>>, vector<16x1xf32>
    %232 = vector.broadcast %231 : vector<16x1xf32> to vector<16x8xf32>
    %233 = arith.addf %230, %232 : vector<16x8xf32>
    %c0_192 = arith.constant 0 : index
    %c0_193 = arith.constant 0 : index
    %234 = vector.load %arg31[%c0_192, %c0_193] : memref<16x8xf32, #tpu.memory_space<vmem>>, vector<16x8xf32>
    tpu.vector_store %arg31[%c0_192, %c0_193], %233 {strides = array<i32>} : memref<16x8xf32, #tpu.memory_space<vmem>>, vector<16x8xf32>,
    %c0_194 = arith.constant 0 : index
    %c0_195 = arith.constant 0 : index
    %235 = vector.load %arg31[%c0_194, %c0_195] : memref<16x8xf32, #tpu.memory_space<vmem>>, vector<16x8xf32>
    %cst_196 = arith.constant 0.000000e+00 : f32
    %236 = vector.broadcast %cst_196 : f32 to vector<16x8xf32>
    %237 = arith.cmpf ogt, %235, %236 : vector<16x8xf32>
    %cst_197 = arith.constant 0.000000e+00 : f32
    %238 = vector.broadcast %cst_197 : f32 to vector<16x8xf32>
    %239 = arith.minimumf %235, %238 : vector<16x8xf32>
    %240 = math.exp %239 : vector<16x8xf32>
    %cst_198 = arith.constant 1.000000e+00 : f32
    %241 = vector.broadcast %cst_198 : f32 to vector<16x8xf32>
    %242 = arith.subf %240, %241 : vector<16x8xf32>
    %243 = arith.select %237, %235, %242 : vector<16x8xi1>, vector<16x8xf32>
    %c0_199 = arith.constant 0 : index
    %c3_200 = arith.constant 3 : index
    %244 = vector.load %arg32[%c0_199, %c3_200] : memref<16x14xf32, #tpu.memory_space<vmem>>, vector<16x8xf32>
    tpu.vector_store %arg32[%c0_199, %c3_200], %243 {strides = array<i32>} : memref<16x14xf32, #tpu.memory_space<vmem>>, vector<16x8xf32>,
    %245 = vector.extract_strided_slice %243 {offsets = [0, 3], sizes = [16, 1], strides = [1, 1]} : vector<16x8xf32> to vector<16x1xf32>
    %c0_201 = arith.constant 0 : index
    %c0_202 = arith.constant 0 : index
    %246 = vector.load %arg32[%c0_201, %c0_202] : memref<16x14xf32, #tpu.memory_space<vmem>>, vector<16x1xf32>
    tpu.vector_store %arg32[%c0_201, %c0_202], %245 {strides = array<i32>} : memref<16x14xf32, #tpu.memory_space<vmem>>, vector<16x1xf32>,
    %247 = vector.extract_strided_slice %243 {offsets = [0, 2], sizes = [16, 1], strides = [1, 1]} : vector<16x8xf32> to vector<16x1xf32>
    %c0_203 = arith.constant 0 : index
    %c1_204 = arith.constant 1 : index
    %248 = vector.load %arg32[%c0_203, %c1_204] : memref<16x14xf32, #tpu.memory_space<vmem>>, vector<16x1xf32>
    tpu.vector_store %arg32[%c0_203, %c1_204], %247 {strides = array<i32>} : memref<16x14xf32, #tpu.memory_space<vmem>>, vector<16x1xf32>,
    %249 = vector.extract_strided_slice %243 {offsets = [0, 1], sizes = [16, 1], strides = [1, 1]} : vector<16x8xf32> to vector<16x1xf32>
    %c0_205 = arith.constant 0 : index
    %c2_206 = arith.constant 2 : index
    %250 = vector.load %arg32[%c0_205, %c2_206] : memref<16x14xf32, #tpu.memory_space<vmem>>, vector<16x1xf32>
    tpu.vector_store %arg32[%c0_205, %c2_206], %249 {strides = array<i32>} : memref<16x14xf32, #tpu.memory_space<vmem>>, vector<16x1xf32>,
    %251 = vector.extract_strided_slice %243 {offsets = [0, 6], sizes = [16, 1], strides = [1, 1]} : vector<16x8xf32> to vector<16x1xf32>
    %c0_207 = arith.constant 0 : index
    %c11 = arith.constant 11 : index
    %252 = vector.load %arg32[%c0_207, %c11] : memref<16x14xf32, #tpu.memory_space<vmem>>, vector<16x1xf32>
    tpu.vector_store %arg32[%c0_207, %c11], %251 {strides = array<i32>} : memref<16x14xf32, #tpu.memory_space<vmem>>, vector<16x1xf32>,
    %253 = vector.extract_strided_slice %243 {offsets = [0, 5], sizes = [16, 1], strides = [1, 1]} : vector<16x8xf32> to vector<16x1xf32>
    %c0_208 = arith.constant 0 : index
    %c12_209 = arith.constant 12 : index
    %254 = vector.load %arg32[%c0_208, %c12_209] : memref<16x14xf32, #tpu.memory_space<vmem>>, vector<16x1xf32>
    tpu.vector_store %arg32[%c0_208, %c12_209], %253 {strides = array<i32>} : memref<16x14xf32, #tpu.memory_space<vmem>>, vector<16x1xf32>,
    %255 = vector.extract_strided_slice %243 {offsets = [0, 4], sizes = [16, 1], strides = [1, 1]} : vector<16x8xf32> to vector<16x1xf32>
    %c0_210 = arith.constant 0 : index
    %c13 = arith.constant 13 : index
    %256 = vector.load %arg32[%c0_210, %c13] : memref<16x14xf32, #tpu.memory_space<vmem>>, vector<16x1xf32>
    tpu.vector_store %arg32[%c0_210, %c13], %255 {strides = array<i32>} : memref<16x14xf32, #tpu.memory_space<vmem>>, vector<16x1xf32>,
    %c0_211 = arith.constant 0 : index
    %c0_212 = arith.constant 0 : index
    %257 = vector.load %arg32[%c0_211, %c0_212] : memref<16x14xf32, #tpu.memory_space<vmem>>, vector<16x8xf32>
    %c0_213 = arith.constant 0 : index
    %c0_214 = arith.constant 0 : index
    %258 = vector.load %arg33[%c0_213, %c0_214] : memref<112x8xf32, #tpu.memory_space<vmem>>, vector<16x8xf32>
    tpu.vector_store %arg33[%c0_213, %c0_214], %257 {strides = array<i32>} : memref<112x8xf32, #tpu.memory_space<vmem>>, vector<16x8xf32>,
    %c0_215 = arith.constant 0 : index
    %c1_216 = arith.constant 1 : index
    %259 = vector.load %arg32[%c0_215, %c1_216] : memref<16x14xf32, #tpu.memory_space<vmem>>, vector<16x8xf32>
    %c16_217 = arith.constant 16 : index
    %c0_218 = arith.constant 0 : index
    %260 = vector.load %arg33[%c16_217, %c0_218] : memref<112x8xf32, #tpu.memory_space<vmem>>, vector<16x8xf32>
    tpu.vector_store %arg33[%c16_217, %c0_218], %259 {strides = array<i32>} : memref<112x8xf32, #tpu.memory_space<vmem>>, vector<16x8xf32>,
    %c0_219 = arith.constant 0 : index
    %c2_220 = arith.constant 2 : index
    %261 = vector.load %arg32[%c0_219, %c2_220] : memref<16x14xf32, #tpu.memory_space<vmem>>, vector<16x8xf32>
    %c32_221 = arith.constant 32 : index
    %c0_222 = arith.constant 0 : index
    %262 = vector.load %arg33[%c32_221, %c0_222] : memref<112x8xf32, #tpu.memory_space<vmem>>, vector<16x8xf32>
    tpu.vector_store %arg33[%c32_221, %c0_222], %261 {strides = array<i32>} : memref<112x8xf32, #tpu.memory_space<vmem>>, vector<16x8xf32>,
    %c0_223 = arith.constant 0 : index
    %c3_224 = arith.constant 3 : index
    %263 = vector.load %arg32[%c0_223, %c3_224] : memref<16x14xf32, #tpu.memory_space<vmem>>, vector<16x8xf32>
    %c48_225 = arith.constant 48 : index
    %c0_226 = arith.constant 0 : index
    %264 = vector.load %arg33[%c48_225, %c0_226] : memref<112x8xf32, #tpu.memory_space<vmem>>, vector<16x8xf32>
    tpu.vector_store %arg33[%c48_225, %c0_226], %263 {strides = array<i32>} : memref<112x8xf32, #tpu.memory_space<vmem>>, vector<16x8xf32>,
    %c0_227 = arith.constant 0 : index
    %c4_228 = arith.constant 4 : index
    %265 = vector.load %arg32[%c0_227, %c4_228] : memref<16x14xf32, #tpu.memory_space<vmem>>, vector<16x8xf32>
    %c64 = arith.constant 64 : index
    %c0_229 = arith.constant 0 : index
    %266 = vector.load %arg33[%c64, %c0_229] : memref<112x8xf32, #tpu.memory_space<vmem>>, vector<16x8xf32>
    tpu.vector_store %arg33[%c64, %c0_229], %265 {strides = array<i32>} : memref<112x8xf32, #tpu.memory_space<vmem>>, vector<16x8xf32>,
    %c0_230 = arith.constant 0 : index
    %c5_231 = arith.constant 5 : index
    %267 = vector.load %arg32[%c0_230, %c5_231] : memref<16x14xf32, #tpu.memory_space<vmem>>, vector<16x8xf32>
    %c80 = arith.constant 80 : index
    %c0_232 = arith.constant 0 : index
    %268 = vector.load %arg33[%c80, %c0_232] : memref<112x8xf32, #tpu.memory_space<vmem>>, vector<16x8xf32>
    tpu.vector_store %arg33[%c80, %c0_232], %267 {strides = array<i32>} : memref<112x8xf32, #tpu.memory_space<vmem>>, vector<16x8xf32>,
    %c0_233 = arith.constant 0 : index
    %c6_234 = arith.constant 6 : index
    %269 = vector.load %arg32[%c0_233, %c6_234] : memref<16x14xf32, #tpu.memory_space<vmem>>, vector<16x8xf32>
    %c96 = arith.constant 96 : index
    %c0_235 = arith.constant 0 : index
    %270 = vector.load %arg33[%c96, %c0_235] : memref<112x8xf32, #tpu.memory_space<vmem>>, vector<16x8xf32>
    tpu.vector_store %arg33[%c96, %c0_235], %269 {strides = array<i32>} : memref<112x8xf32, #tpu.memory_space<vmem>>, vector<16x8xf32>,
    %c0_236 = arith.constant 0 : index
    %c0_237 = arith.constant 0 : index
    %271 = vector.load %arg16[%c0_236, %c0_237] : memref<16x112xbf16, #tpu.memory_space<vmem>>, vector<16x112xbf16>
    %c0_238 = arith.constant 0 : index
    %c0_239 = arith.constant 0 : index
    %272 = vector.load %arg33[%c0_238, %c0_239] : memref<112x8xf32, #tpu.memory_space<vmem>>, vector<112x8xf32>
    %273 = arith.truncf %272 : vector<112x8xf32> to vector<112x8xbf16>
    %cst_240 = arith.constant dense<0.000000e+00> : vector<16x8xf32>
    %274 = tpu.matmul %271, %273, %cst_240 {dimension_numbers = #tpu.dot_dimension_numbers<[1], [0], [0], [1], [0, 0, 1, 1], [], []>} : vector<16x112xbf16>, vector<112x8xbf16>, vector<16x8xf32> -> vector<16x8xf32>
    %c0_241 = arith.constant 0 : index
    %c0_242 = arith.constant 0 : index
    %275 = vector.load %arg17[%c0_241, %c0_242] : memref<16x1xf32, #tpu.memory_space<vmem>>, vector<16x1xf32>
    %276 = vector.broadcast %275 : vector<16x1xf32> to vector<16x8xf32>
    %277 = arith.addf %274, %276 : vector<16x8xf32>
    %c0_243 = arith.constant 0 : index
    %c0_244 = arith.constant 0 : index
    %278 = vector.load %arg18[%c0_243, %c0_244] : memref<48x16xbf16, #tpu.memory_space<vmem>>, vector<48x16xbf16>
    %279 = arith.truncf %277 : vector<16x8xf32> to vector<16x8xbf16>
    %cst_245 = arith.constant dense<0.000000e+00> : vector<48x8xf32>
    %280 = tpu.matmul %278, %279, %cst_245 {dimension_numbers = #tpu.dot_dimension_numbers<[1], [0], [0], [1], [0, 0, 1, 1], [], []>} : vector<48x16xbf16>, vector<16x8xbf16>, vector<48x8xf32> -> vector<48x8xf32>
    %c0_246 = arith.constant 0 : index
    %c0_247 = arith.constant 0 : index
    %281 = vector.load %arg19[%c0_246, %c0_247] : memref<48x1xf32, #tpu.memory_space<vmem>>, vector<48x1xf32>
    %282 = vector.broadcast %281 : vector<48x1xf32> to vector<48x8xf32>
    %283 = arith.addf %280, %282 : vector<48x8xf32>
    %284 = vector.extract_strided_slice %283 {offsets = [0, 0], sizes = [8, 8], strides = [1, 1]} : vector<48x8xf32> to vector<8x8xf32>
    %285 = vector.extract_strided_slice %283 {offsets = [8, 0], sizes = [8, 8], strides = [1, 1]} : vector<48x8xf32> to vector<8x8xf32>
    %286 = arith.subf %285, %284 : vector<8x8xf32>
    %287 = math.absf %286 : vector<8x8xf32>
    %cst_248 = arith.constant 0.000000e+00 : f32
    %288 = vector.broadcast %cst_248 : f32 to vector<8x8xf32>
    %289 = arith.subf %288, %287 : vector<8x8xf32>
    %290 = math.exp %289 : vector<8x8xf32>
    %cst_249 = arith.constant 0.000000e+00 : f32
    %291 = vector.broadcast %cst_249 : f32 to vector<8x8xf32>
    %292 = arith.cmpf oge, %286, %291 : vector<8x8xf32>
    %cst_250 = arith.constant 1.000000e+00 : f32
    %293 = vector.broadcast %cst_250 : f32 to vector<8x8xf32>
    %294 = arith.addf %293, %290 : vector<8x8xf32>
    %cst_251 = arith.constant 1.000000e+00 : f32
    %295 = vector.broadcast %cst_251 : f32 to vector<8x8xf32>
    %296 = arith.divf %295, %294 : vector<8x8xf32>
    %cst_252 = arith.constant 1.000000e+00 : f32
    %297 = vector.broadcast %cst_252 : f32 to vector<8x8xf32>
    %298 = arith.addf %297, %290 : vector<8x8xf32>
    %299 = arith.divf %290, %298 : vector<8x8xf32>
    %300 = arith.select %292, %296, %299 : vector<8x8xi1>, vector<8x8xf32>
    %cst_253 = arith.constant 1.000000e+00 : f32
    %301 = vector.broadcast %cst_253 : f32 to vector<8x8xf32>
    %302 = arith.subf %301, %300 : vector<8x8xf32>
    %c0_254 = arith.constant 0 : index
    %c0_255 = arith.constant 0 : index
    %c0_256 = arith.constant 0 : index
    %c0_257 = arith.constant 0 : index
    %303 = vector.load %arg20[%c0_254, %c0_255, %c0_256, %c0_257] : memref<1x2x8x8xf32, #tpu.memory_space<vmem>>, vector<1x1x8x8xf32>
    %304 = vector.shape_cast %303 : vector<1x1x8x8xf32> to vector<8x8xf32>
    %305 = vector.shape_cast %302 : vector<8x8xf32> to vector<1x1x8x8xf32>
    tpu.vector_store %arg20[%c0_254, %c0_255, %c0_256, %c0_257], %305 {strides = array<i32>} : memref<1x2x8x8xf32, #tpu.memory_space<vmem>>, vector<1x1x8x8xf32>,
    %c0_258 = arith.constant 0 : index
    %c1_259 = arith.constant 1 : index
    %c0_260 = arith.constant 0 : index
    %c0_261 = arith.constant 0 : index
    %306 = vector.load %arg20[%c0_258, %c1_259, %c0_260, %c0_261] : memref<1x2x8x8xf32, #tpu.memory_space<vmem>>, vector<1x1x8x8xf32>
    %307 = vector.shape_cast %306 : vector<1x1x8x8xf32> to vector<8x8xf32>
    %308 = vector.shape_cast %300 : vector<8x8xf32> to vector<1x1x8x8xf32>
    tpu.vector_store %arg20[%c0_258, %c1_259, %c0_260, %c0_261], %308 {strides = array<i32>} : memref<1x2x8x8xf32, #tpu.memory_space<vmem>>, vector<1x1x8x8xf32>,
    %309 = vector.extract_strided_slice %283 {offsets = [16, 0], sizes = [32, 8], strides = [1, 1]} : vector<48x8xf32> to vector<32x8xf32>
    %c0_262 = arith.constant 0 : index
    %c0_263 = arith.constant 0 : index
    %c0_264 = arith.constant 0 : index
    %310 = vector.load %arg21[%c0_262, %c0_263, %c0_264] : memref<1x32x8xf32, #tpu.memory_space<vmem>>, vector<1x32x8xf32>
    %311 = vector.shape_cast %310 : vector<1x32x8xf32> to vector<32x8xf32>
    %312 = vector.shape_cast %309 : vector<32x8xf32> to vector<1x32x8xf32>
    tpu.vector_store %arg21[%c0_262, %c0_263, %c0_264], %312 {strides = array<i32>} : memref<1x32x8xf32, #tpu.memory_space<vmem>>, vector<1x32x8xf32>,
    return
  }
  func.func @transform_0(%arg0: i32) -> (i32, i32, i32) {
    %c0_i32 = arith.constant 0 : i32
    %c0_i32_0 = arith.constant 0 : i32
    %c0_i32_1 = arith.constant 0 : i32
    return %arg0, %c0_i32, %c0_i32_0 : i32, i32, i32
  }
  func.func @transform_1(%arg0: i32) -> (i32, i32) {
    %c0_i32 = arith.constant 0 : i32
    %c0_i32_0 = arith.constant 0 : i32
    %c0_i32_1 = arith.constant 0 : i32
    return %c0_i32, %c0_i32_0 : i32, i32
  }
  func.func @transform_2(%arg0: i32) -> (i32, i32) {
    %c0_i32 = arith.constant 0 : i32
    %c0_i32_0 = arith.constant 0 : i32
    %c0_i32_1 = arith.constant 0 : i32
    return %c0_i32, %c0_i32_0 : i32, i32
  }
  func.func @transform_3(%arg0: i32) -> (i32, i32) {
    %c0_i32 = arith.constant 0 : i32
    %c0_i32_0 = arith.constant 0 : i32
    %c0_i32_1 = arith.constant 0 : i32
    return %c0_i32, %c0_i32_0 : i32, i32
  }
  func.func @transform_4(%arg0: i32) -> (i32, i32) {
    %c0_i32 = arith.constant 0 : i32
    %c0_i32_0 = arith.constant 0 : i32
    %c0_i32_1 = arith.constant 0 : i32
    return %c0_i32, %c0_i32_0 : i32, i32
  }
  func.func @transform_5(%arg0: i32) -> (i32, i32) {
    %c0_i32 = arith.constant 0 : i32
    %c0_i32_0 = arith.constant 0 : i32
    %c0_i32_1 = arith.constant 0 : i32
    return %c0_i32, %c0_i32_0 : i32, i32
  }
  func.func @transform_6(%arg0: i32) -> (i32, i32) {
    %c0_i32 = arith.constant 0 : i32
    %c0_i32_0 = arith.constant 0 : i32
    %c0_i32_1 = arith.constant 0 : i32
    return %c0_i32, %c0_i32_0 : i32, i32
  }
  func.func @transform_7(%arg0: i32) -> (i32, i32) {
    %c0_i32 = arith.constant 0 : i32
    %c0_i32_0 = arith.constant 0 : i32
    %c0_i32_1 = arith.constant 0 : i32
    return %c0_i32, %c0_i32_0 : i32, i32
  }
  func.func @transform_8(%arg0: i32) -> (i32, i32) {
    %c0_i32 = arith.constant 0 : i32
    %c0_i32_0 = arith.constant 0 : i32
    %c0_i32_1 = arith.constant 0 : i32
    return %c0_i32, %c0_i32_0 : i32, i32
  }
  func.func @transform_9(%arg0: i32) -> (i32, i32) {
    %c0_i32 = arith.constant 0 : i32
    %c0_i32_0 = arith.constant 0 : i32
    %c0_i32_1 = arith.constant 0 : i32
    return %c0_i32, %c0_i32_0 : i32, i32
  }
  func.func @transform_10(%arg0: i32) -> (i32, i32) {
    %c0_i32 = arith.constant 0 : i32
    %c0_i32_0 = arith.constant 0 : i32
    %c0_i32_1 = arith.constant 0 : i32
    return %c0_i32, %c0_i32_0 : i32, i32
  }
  func.func @transform_11(%arg0: i32) -> (i32, i32) {
    %c0_i32 = arith.constant 0 : i32
    %c0_i32_0 = arith.constant 0 : i32
    %c0_i32_1 = arith.constant 0 : i32
    return %c0_i32, %c0_i32_0 : i32, i32
  }
  func.func @transform_12(%arg0: i32) -> (i32, i32) {
    %c0_i32 = arith.constant 0 : i32
    %c0_i32_0 = arith.constant 0 : i32
    %c0_i32_1 = arith.constant 0 : i32
    return %c0_i32, %c0_i32_0 : i32, i32
  }
  func.func @transform_13(%arg0: i32) -> (i32, i32) {
    %c0_i32 = arith.constant 0 : i32
    %c0_i32_0 = arith.constant 0 : i32
    %c0_i32_1 = arith.constant 0 : i32
    return %c0_i32, %c0_i32_0 : i32, i32
  }
  func.func @transform_14(%arg0: i32) -> (i32, i32) {
    %c0_i32 = arith.constant 0 : i32
    %c0_i32_0 = arith.constant 0 : i32
    %c0_i32_1 = arith.constant 0 : i32
    return %c0_i32, %c0_i32_0 : i32, i32
  }
  func.func @transform_15(%arg0: i32) -> (i32, i32) {
    %c0_i32 = arith.constant 0 : i32
    %c0_i32_0 = arith.constant 0 : i32
    %c0_i32_1 = arith.constant 0 : i32
    return %c0_i32, %c0_i32_0 : i32, i32
  }
  func.func @transform_16(%arg0: i32) -> (i32, i32) {
    %c0_i32 = arith.constant 0 : i32
    %c0_i32_0 = arith.constant 0 : i32
    %c0_i32_1 = arith.constant 0 : i32
    return %c0_i32, %c0_i32_0 : i32, i32
  }
  func.func @transform_17(%arg0: i32) -> (i32, i32) {
    %c0_i32 = arith.constant 0 : i32
    %c0_i32_0 = arith.constant 0 : i32
    %c0_i32_1 = arith.constant 0 : i32
    return %c0_i32, %c0_i32_0 : i32, i32
  }
  func.func @transform_18(%arg0: i32) -> (i32, i32) {
    %c0_i32 = arith.constant 0 : i32
    %c0_i32_0 = arith.constant 0 : i32
    %c0_i32_1 = arith.constant 0 : i32
    return %c0_i32, %c0_i32_0 : i32, i32
  }
  func.func @transform_19(%arg0: i32) -> (i32, i32, i32, i32) {
    %c0_i32 = arith.constant 0 : i32
    %c0_i32_0 = arith.constant 0 : i32
    %c0_i32_1 = arith.constant 0 : i32
    %c0_i32_2 = arith.constant 0 : i32
    return %arg0, %c0_i32, %c0_i32_0, %c0_i32_1 : i32, i32, i32, i32
  }
  func.func @transform_20(%arg0: i32) -> (i32, i32, i32) {
    %c0_i32 = arith.constant 0 : i32
    %c0_i32_0 = arith.constant 0 : i32
    %c0_i32_1 = arith.constant 0 : i32
    return %arg0, %c0_i32, %c0_i32_0 : i32, i32, i32
  }
}

</mosaic_0001>

<llo_original>
// kernel: _lambda_.1
$region0: #{_lambda_.1}
  #allocation0 [shape = 'u32[]', space=smem, size = 0x4, offset = 0x4, fixed_abs, tag = 'smem constant byte address 0x4 - core index']
  #allocation1 [shape = 'u32[72,128]{1,0:T(1,128)}', space=vmem, size = 0x9000, scoped, tag = 'internal scratch']
  #allocation2 [shape = 'f32[1,70]{1,0:T(1,128)}', space=vmem, size = 0x200, scoped, tag = 'scratch operand']
  #allocation3 [shape = 'f32[7,64]{1,0:T(8,128)}', space=vmem, size = 0x1000, scoped, tag = 'scratch operand']
  #allocation4 [shape = 'f32[4,66]{1,0:T(4,128)}', space=vmem, size = 0x800, scoped, tag = 'scratch operand']
  #allocation5 [shape = 'f32[12,64]{1,0:T(8,128)}', space=vmem, size = 0x2000, scoped, tag = 'scratch operand']
  #allocation6 [shape = 'f32[4,66]{1,0:T(4,128)}', space=vmem, size = 0x800, scoped, tag = 'scratch operand']
  #allocation7 [shape = 'f32[8,32]{1,0:T(8,128)}', space=vmem, size = 0x1000, scoped, tag = 'scratch operand']
  #allocation8 [shape = 'f32[8,34]{1,0:T(8,128)}', space=vmem, size = 0x1000, scoped, tag = 'scratch operand']
  #allocation9 [shape = 'f32[24,32]{1,0:T(8,128)}', space=vmem, size = 0x3000, scoped, tag = 'scratch operand']
  #allocation10 [shape = 'f32[8,36]{1,0:T(8,128)}', space=vmem, size = 0x1000, scoped, tag = 'scratch operand']
  #allocation11 [shape = 'f32[16,8]{1,0:T(8,128)}', space=vmem, size = 0x2000, scoped, tag = 'scratch operand']
  #allocation12 [shape = 'f32[16,14]{1,0:T(8,128)}', space=vmem, size = 0x2000, scoped, tag = 'scratch operand']
  #allocation13 [shape = 'f32[112,8]{1,0:T(8,128)}', space=vmem, size = 0xe000, scoped, tag = 'scratch operand']
  %s0 = inlined_call_operand.vmem [shape: f32[2,1,64], index: 0, kind: input, shape index: {}]
  %s1 = inlined_call_operand.vmem [shape: bf16[4,7], index: 1, kind: input, shape index: {}]
  %s2 = inlined_call_operand.vmem [shape: f32[4,1], index: 2, kind: input, shape index: {}]
  %s3 = inlined_call_operand.vmem [shape: bf16[2,12], index: 3, kind: input, shape index: {}]
  %s4 = inlined_call_operand.vmem [shape: f32[2,1], index: 4, kind: input, shape index: {}]
  %s5 = inlined_call_operand.vmem [shape: bf16[4,2], index: 5, kind: input, shape index: {}]
  %s6 = inlined_call_operand.vmem [shape: f32[4,1], index: 6, kind: input, shape index: {}]
  %s7 = inlined_call_operand.vmem [shape: bf16[8,16], index: 7, kind: input, shape index: {}]
  %s8 = inlined_call_operand.vmem [shape: f32[8,1], index: 8, kind: input, shape index: {}]
  %s9 = inlined_call_operand.vmem [shape: bf16[4,24], index: 9, kind: input, shape index: {}]
  %s10 = inlined_call_operand.vmem [shape: f32[4,1], index: 10, kind: input, shape index: {}]
  %s11 = inlined_call_operand.vmem [shape: bf16[8,4], index: 11, kind: input, shape index: {}]
  %s12 = inlined_call_operand.vmem [shape: f32[8,1], index: 12, kind: input, shape index: {}]
  %s13 = inlined_call_operand.vmem [shape: bf16[16,64], index: 13, kind: input, shape index: {}]
  %s14 = inlined_call_operand.vmem [shape: f32[16,1], index: 14, kind: input, shape index: {}]
  %s15 = inlined_call_operand.vmem [shape: bf16[16,112], index: 15, kind: input, shape index: {}]
  %s16 = inlined_call_operand.vmem [shape: f32[16,1], index: 16, kind: input, shape index: {}]
  %s17 = inlined_call_operand.vmem [shape: bf16[48,16], index: 17, kind: input, shape index: {}]
  %s18 = inlined_call_operand.vmem [shape: f32[48,1], index: 18, kind: input, shape index: {}]
  %s19 = inlined_call_operand.vmem [shape: f32[2,2,8,8], index: 19, kind: output, shape index: {0}]
  %s20 = inlined_call_operand.vmem [shape: f32[2,32,8], index: 20, kind: output, shape index: {1}]
  %21 = xla_tuple %s19, %s20
  %s22 = sld [smem:[#allocation0]]
  $region117: #{_lambda_.1} parent=0
    _
  %s24 = ssub.s32 1, %s22
  %s25 = scalar_select 0, %s24, %s22
  loop: start=0, step=1, limit=4
  $region2: #{_lambda_.1} parent=0 // loop_pre_header
    _
  $region3: #{_lambda_.1} parent=0 // loop_header
    %s27 = sphi 0, %s31
    %p28 = scmp.ge.s32.totalorder %s27, 4
    %s37 = sphi 0, %s39
    %s40 = sphi 0, %s37
    %s41 = sphi 0, %s40
    %s57 = sphi 0, %s41
    %s61 = sphi 0, %s61
    %s63 = sphi 0, %s61
    %s64 = sphi 0, %s63
    %s78 = sphi 0, %s64
    %s82 = sphi 0, %s82
    %s84 = sphi 0, %s82
    %s85 = sphi 0, %s84
    %s99 = sphi 0, %s85
    %s103 = sphi 0, %s103
    %s105 = sphi 0, %s103
    %s106 = sphi 0, %s105
    %s120 = sphi 0, %s106
    %s124 = sphi 0, %s124
    %s126 = sphi 0, %s124
    %s127 = sphi 0, %s126
    %s141 = sphi 0, %s127
    %s145 = sphi 0, %s145
    %s147 = sphi 0, %s145
    %s148 = sphi 0, %s147
    %s162 = sphi 0, %s148
    %s166 = sphi 0, %s166
    %s168 = sphi 0, %s166
    %s169 = sphi 0, %s168
    %s183 = sphi 0, %s169
    %s187 = sphi 0, %s187
    %s189 = sphi 0, %s187
    %s190 = sphi 0, %s189
    %s204 = sphi 0, %s190
    %s208 = sphi 0, %s208
    %s210 = sphi 0, %s208
    %s211 = sphi 0, %s210
    %s225 = sphi 0, %s211
    %s229 = sphi 0, %s229
    %s231 = sphi 0, %s229
    %s232 = sphi 0, %s231
    %s246 = sphi 0, %s232
    %s250 = sphi 0, %s250
    %s252 = sphi 0, %s250
    %s253 = sphi 0, %s252
    %s267 = sphi 0, %s253
    %s271 = sphi 0, %s271
    %s273 = sphi 0, %s271
    %s274 = sphi 0, %s273
    %s288 = sphi 0, %s274
    %s292 = sphi 0, %s292
    %s294 = sphi 0, %s292
    %s295 = sphi 0, %s294
    %s309 = sphi 0, %s295
    %s313 = sphi 0, %s313
    %s315 = sphi 0, %s313
    %s316 = sphi 0, %s315
    %s330 = sphi 0, %s316
    %s334 = sphi 0, %s334
    %s336 = sphi 0, %s334
    %s337 = sphi 0, %s336
    %s351 = sphi 0, %s337
    %s355 = sphi 0, %s355
    %s357 = sphi 0, %s355
    %s358 = sphi 0, %s357
    %s372 = sphi 0, %s358
    %s376 = sphi 0, %s376
    %s378 = sphi 0, %s376
    %s379 = sphi 0, %s378
    %s393 = sphi 0, %s379
    %s397 = sphi 0, %s397
    %s399 = sphi 0, %s397
    %s400 = sphi 0, %s399
    %s414 = sphi 0, %s400
    %s418 = sphi 0, %s418
    %s420 = sphi 0, %s418
    %s421 = sphi 0, %s420
    %s435 = sphi 0, %s421
    %s441 = sphi 0, %s443
    %s444 = sphi 0, %s441
    %s445 = sphi 0, %s444
    %s461 = sphi 0, %s445
    %s467 = sphi 0, %s469
    %s470 = sphi 0, %s467
    %s471 = sphi 0, %s470
    %s487 = sphi 0, %s471
  $region4: #{_lambda_.1} parent=0 // loop_header_branch
    %30 = sbr.rel (%p28) target = $region8
  $region5: #{_lambda_.1} parent=0 // loop_body
    %s32 = ssub.s32 %s27, 1
    %s33 = ssub.s32 %s27, 2
    %s34 = sadd.s32 %s27, 1
    %s35 = ssub.s32 %s27, %s34
    %p36 = scmp.eq.s32.totalorder %s35, 0
    %s38 = sadd.s32 %s37, 1
    %s39 = scalar_select %p36, %s37, %s38
    %p42 = pneg %p36
    %p43 = scmp.eq.s32.totalorder %s27, 1
    %p44 = por %p42, %p43
    %p45 = scmp.ne.s32.totalorder %s37, %s40
    %p46 = scmp.eq.s32.totalorder %s27, 0
    %p47 = por %p45, %p46
    %p48 = scmp.ne.s32.totalorder %s37, %s40
    %p49 = scmp.eq.s32.totalorder %s32, 1
    %p50 = por %p48, %p49
    %p51 = scmp.ne.s32.totalorder %s40, %s41
    %p52 = scmp.eq.s32.totalorder %s32, 0
    %p53 = por %p51, %p52
    %p54 = scmp.ne.s32.totalorder %s40, %s41
    %p55 = scmp.eq.s32.totalorder %s33, 1
    %p56 = por %p54, %p55
    %p58 = scmp.ne.s32.totalorder %s41, %s57
    %p59 = scmp.eq.s32.totalorder %s33, 0
    %p60 = por %p58, %p59
    %s62 = sadd.s32 %s61, 1
    %p65 = scmp.eq.s32.totalorder %s27, 1
    %p66 = scmp.ne.s32.totalorder %s61, %s63
    %p67 = scmp.eq.s32.totalorder %s27, 0
    %p68 = por %p66, %p67
    %p69 = scmp.ne.s32.totalorder %s61, %s63
    %p70 = scmp.eq.s32.totalorder %s32, 1
    %p71 = por %p69, %p70
    %p72 = scmp.ne.s32.totalorder %s63, %s64
    %p73 = scmp.eq.s32.totalorder %s32, 0
    %p74 = por %p72, %p73
    %p75 = scmp.ne.s32.totalorder %s63, %s64
    %p76 = scmp.eq.s32.totalorder %s33, 1
    %p77 = por %p75, %p76
    %p79 = scmp.ne.s32.totalorder %s64, %s78
    %p80 = scmp.eq.s32.totalorder %s33, 0
    %p81 = por %p79, %p80
    %s83 = sadd.s32 %s82, 1
    %p86 = scmp.eq.s32.totalorder %s27, 1
    %p87 = scmp.ne.s32.totalorder %s82, %s84
    %p88 = scmp.eq.s32.totalorder %s27, 0
    %p89 = por %p87, %p88
    %p90 = scmp.ne.s32.totalorder %s82, %s84
    %p91 = scmp.eq.s32.totalorder %s32, 1
    %p92 = por %p90, %p91
    %p93 = scmp.ne.s32.totalorder %s84, %s85
    %p94 = scmp.eq.s32.totalorder %s32, 0
    %p95 = por %p93, %p94
    %p96 = scmp.ne.s32.totalorder %s84, %s85
    %p97 = scmp.eq.s32.totalorder %s33, 1
    %p98 = por %p96, %p97
    %p100 = scmp.ne.s32.totalorder %s85, %s99
    %p101 = scmp.eq.s32.totalorder %s33, 0
    %p102 = por %p100, %p101
    %s104 = sadd.s32 %s103, 1
    %p107 = scmp.eq.s32.totalorder %s27, 1
    %p108 = scmp.ne.s32.totalorder %s103, %s105
    %p109 = scmp.eq.s32.totalorder %s27, 0
    %p110 = por %p108, %p109
    %p111 = scmp.ne.s32.totalorder %s103, %s105
    %p112 = scmp.eq.s32.totalorder %s32, 1
    %p113 = por %p111, %p112
    %p114 = scmp.ne.s32.totalorder %s105, %s106
    %p115 = scmp.eq.s32.totalorder %s32, 0
    %p116 = por %p114, %p115
    %p117 = scmp.ne.s32.totalorder %s105, %s106
    %p118 = scmp.eq.s32.totalorder %s33, 1
    %p119 = por %p117, %p118
    %p121 = scmp.ne.s32.totalorder %s106, %s120
    %p122 = scmp.eq.s32.totalorder %s33, 0
    %p123 = por %p121, %p122
    %s125 = sadd.s32 %s124, 1
    %p128 = scmp.eq.s32.totalorder %s27, 1
    %p129 = scmp.ne.s32.totalorder %s124, %s126
    %p130 = scmp.eq.s32.totalorder %s27, 0
    %p131 = por %p129, %p130
    %p132 = scmp.ne.s32.totalorder %s124, %s126
    %p133 = scmp.eq.s32.totalorder %s32, 1
    %p134 = por %p132, %p133
    %p135 = scmp.ne.s32.totalorder %s126, %s127
    %p136 = scmp.eq.s32.totalorder %s32, 0
    %p137 = por %p135, %p136
    %p138 = scmp.ne.s32.totalorder %s126, %s127
    %p139 = scmp.eq.s32.totalorder %s33, 1
    %p140 = por %p138, %p139
    %p142 = scmp.ne.s32.totalorder %s127, %s141
    %p143 = scmp.eq.s32.totalorder %s33, 0
    %p144 = por %p142, %p143
    %s146 = sadd.s32 %s145, 1
    %p149 = scmp.eq.s32.totalorder %s27, 1
    %p150 = scmp.ne.s32.totalorder %s145, %s147
    %p151 = scmp.eq.s32.totalorder %s27, 0
    %p152 = por %p150, %p151
    %p153 = scmp.ne.s32.totalorder %s145, %s147
    %p154 = scmp.eq.s32.totalorder %s32, 1
    %p155 = por %p153, %p154
    %p156 = scmp.ne.s32.totalorder %s147, %s148
    %p157 = scmp.eq.s32.totalorder %s32, 0
    %p158 = por %p156, %p157
    %p159 = scmp.ne.s32.totalorder %s147, %s148
    %p160 = scmp.eq.s32.totalorder %s33, 1
    %p161 = por %p159, %p160
    %p163 = scmp.ne.s32.totalorder %s148, %s162
    %p164 = scmp.eq.s32.totalorder %s33, 0
    %p165 = por %p163, %p164
    %s167 = sadd.s32 %s166, 1
    %p170 = scmp.eq.s32.totalorder %s27, 1
    %p171 = scmp.ne.s32.totalorder %s166, %s168
    %p172 = scmp.eq.s32.totalorder %s27, 0
    %p173 = por %p171, %p172
    %p174 = scmp.ne.s32.totalorder %s166, %s168
    %p175 = scmp.eq.s32.totalorder %s32, 1
    %p176 = por %p174, %p175
    %p177 = scmp.ne.s32.totalorder %s168, %s169
    %p178 = scmp.eq.s32.totalorder %s32, 0
    %p179 = por %p177, %p178
    %p180 = scmp.ne.s32.totalorder %s168, %s169
    %p181 = scmp.eq.s32.totalorder %s33, 1
    %p182 = por %p180, %p181
    %p184 = scmp.ne.s32.totalorder %s169, %s183
    %p185 = scmp.eq.s32.totalorder %s33, 0
    %p186 = por %p184, %p185
    %s188 = sadd.s32 %s187, 1
    %p191 = scmp.eq.s32.totalorder %s27, 1
    %p192 = scmp.ne.s32.totalorder %s187, %s189
    %p193 = scmp.eq.s32.totalorder %s27, 0
    %p194 = por %p192, %p193
    %p195 = scmp.ne.s32.totalorder %s187, %s189
    %p196 = scmp.eq.s32.totalorder %s32, 1
    %p197 = por %p195, %p196
    %p198 = scmp.ne.s32.totalorder %s189, %s190
    %p199 = scmp.eq.s32.totalorder %s32, 0
    %p200 = por %p198, %p199
    %p201 = scmp.ne.s32.totalorder %s189, %s190
    %p202 = scmp.eq.s32.totalorder %s33, 1
    %p203 = por %p201, %p202
    %p205 = scmp.ne.s32.totalorder %s190, %s204
    %p206 = scmp.eq.s32.totalorder %s33, 0
    %p207 = por %p205, %p206
    %s209 = sadd.s32 %s208, 1
    %p212 = scmp.eq.s32.totalorder %s27, 1
    %p213 = scmp.ne.s32.totalorder %s208, %s210
    %p214 = scmp.eq.s32.totalorder %s27, 0
    %p215 = por %p213, %p214
    %p216 = scmp.ne.s32.totalorder %s208, %s210
    %p217 = scmp.eq.s32.totalorder %s32, 1
    %p218 = por %p216, %p217
    %p219 = scmp.ne.s32.totalorder %s210, %s211
    %p220 = scmp.eq.s32.totalorder %s32, 0
    %p221 = por %p219, %p220
    %p222 = scmp.ne.s32.totalorder %s210, %s211
    %p223 = scmp.eq.s32.totalorder %s33, 1
    %p224 = por %p222, %p223
    %p226 = scmp.ne.s32.totalorder %s211, %s225
    %p227 = scmp.eq.s32.totalorder %s33, 0
    %p228 = por %p226, %p227
    %s230 = sadd.s32 %s229, 1
    %p233 = scmp.eq.s32.totalorder %s27, 1
    %p234 = scmp.ne.s32.totalorder %s229, %s231
    %p235 = scmp.eq.s32.totalorder %s27, 0
    %p236 = por %p234, %p235
    %p237 = scmp.ne.s32.totalorder %s229, %s231
    %p238 = scmp.eq.s32.totalorder %s32, 1
    %p239 = por %p237, %p238
    %p240 = scmp.ne.s32.totalorder %s231, %s232
    %p241 = scmp.eq.s32.totalorder %s32, 0
    %p242 = por %p240, %p241
    %p243 = scmp.ne.s32.totalorder %s231, %s232
    %p244 = scmp.eq.s32.totalorder %s33, 1
    %p245 = por %p243, %p244
    %p247 = scmp.ne.s32.totalorder %s232, %s246
    %p248 = scmp.eq.s32.totalorder %s33, 0
    %p249 = por %p247, %p248
    %s251 = sadd.s32 %s250, 1
    %p254 = scmp.eq.s32.totalorder %s27, 1
    %p255 = scmp.ne.s32.totalorder %s250, %s252
    %p256 = scmp.eq.s32.totalorder %s27, 0
    %p257 = por %p255, %p256
    %p258 = scmp.ne.s32.totalorder %s250, %s252
    %p259 = scmp.eq.s32.totalorder %s32, 1
    %p260 = por %p258, %p259
    %p261 = scmp.ne.s32.totalorder %s252, %s253
    %p262 = scmp.eq.s32.totalorder %s32, 0
    %p263 = por %p261, %p262
    %p264 = scmp.ne.s32.totalorder %s252, %s253
    %p265 = scmp.eq.s32.totalorder %s33, 1
    %p266 = por %p264, %p265
    %p268 = scmp.ne.s32.totalorder %s253, %s267
    %p269 = scmp.eq.s32.totalorder %s33, 0
    %p270 = por %p268, %p269
    %s272 = sadd.s32 %s271, 1
    %p275 = scmp.eq.s32.totalorder %s27, 1
    %p276 = scmp.ne.s32.totalorder %s271, %s273
    %p277 = scmp.eq.s32.totalorder %s27, 0
    %p278 = por %p276, %p277
    %p279 = scmp.ne.s32.totalorder %s271, %s273
    %p280 = scmp.eq.s32.totalorder %s32, 1
    %p281 = por %p279, %p280
    %p282 = scmp.ne.s32.totalorder %s273, %s274
    %p283 = scmp.eq.s32.totalorder %s32, 0
    %p284 = por %p282, %p283
    %p285 = scmp.ne.s32.totalorder %s273, %s274
    %p286 = scmp.eq.s32.totalorder %s33, 1
    %p287 = por %p285, %p286
    %p289 = scmp.ne.s32.totalorder %s274, %s288
    %p290 = scmp.eq.s32.totalorder %s33, 0
    %p291 = por %p289, %p290
    %s293 = sadd.s32 %s292, 1
    %p296 = scmp.eq.s32.totalorder %s27, 1
    %p297 = scmp.ne.s32.totalorder %s292, %s294
    %p298 = scmp.eq.s32.totalorder %s27, 0
    %p299 = por %p297, %p298
    %p300 = scmp.ne.s32.totalorder %s292, %s294
    %p301 = scmp.eq.s32.totalorder %s32, 1
    %p302 = por %p300, %p301
    %p303 = scmp.ne.s32.totalorder %s294, %s295
    %p304 = scmp.eq.s32.totalorder %s32, 0
    %p305 = por %p303, %p304
    %p306 = scmp.ne.s32.totalorder %s294, %s295
    %p307 = scmp.eq.s32.totalorder %s33, 1
    %p308 = por %p306, %p307
    %p310 = scmp.ne.s32.totalorder %s295, %s309
    %p311 = scmp.eq.s32.totalorder %s33, 0
    %p312 = por %p310, %p311
    %s314 = sadd.s32 %s313, 1
    %p317 = scmp.eq.s32.totalorder %s27, 1
    %p318 = scmp.ne.s32.totalorder %s313, %s315
    %p319 = scmp.eq.s32.totalorder %s27, 0
    %p320 = por %p318, %p319
    %p321 = scmp.ne.s32.totalorder %s313, %s315
    %p322 = scmp.eq.s32.totalorder %s32, 1
    %p323 = por %p321, %p322
    %p324 = scmp.ne.s32.totalorder %s315, %s316
    %p325 = scmp.eq.s32.totalorder %s32, 0
    %p326 = por %p324, %p325
    %p327 = scmp.ne.s32.totalorder %s315, %s316
    %p328 = scmp.eq.s32.totalorder %s33, 1
    %p329 = por %p327, %p328
    %p331 = scmp.ne.s32.totalorder %s316, %s330
    %p332 = scmp.eq.s32.totalorder %s33, 0
    %p333 = por %p331, %p332
    %s335 = sadd.s32 %s334, 1
    %p338 = scmp.eq.s32.totalorder %s27, 1
    %p339 = scmp.ne.s32.totalorder %s334, %s336
    %p340 = scmp.eq.s32.totalorder %s27, 0
    %p341 = por %p339, %p340
    %p342 = scmp.ne.s32.totalorder %s334, %s336
    %p343 = scmp.eq.s32.totalorder %s32, 1
    %p344 = por %p342, %p343
    %p345 = scmp.ne.s32.totalorder %s336, %s337
    %p346 = scmp.eq.s32.totalorder %s32, 0
    %p347 = por %p345, %p346
    %p348 = scmp.ne.s32.totalorder %s336, %s337
    %p349 = scmp.eq.s32.totalorder %s33, 1
    %p350 = por %p348, %p349
    %p352 = scmp.ne.s32.totalorder %s337, %s351
    %p353 = scmp.eq.s32.totalorder %s33, 0
    %p354 = por %p352, %p353
    %s356 = sadd.s32 %s355, 1
    %p359 = scmp.eq.s32.totalorder %s27, 1
    %p360 = scmp.ne.s32.totalorder %s355, %s357
    %p361 = scmp.eq.s32.totalorder %s27, 0
    %p362 = por %p360, %p361
    %p363 = scmp.ne.s32.totalorder %s355, %s357
    %p364 = scmp.eq.s32.totalorder %s32, 1
    %p365 = por %p363, %p364
    %p366 = scmp.ne.s32.totalorder %s357, %s358
    %p367 = scmp.eq.s32.totalorder %s32, 0
    %p368 = por %p366, %p367
    %p369 = scmp.ne.s32.totalorder %s357, %s358
    %p370 = scmp.eq.s32.totalorder %s33, 1
    %p371 = por %p369, %p370
    %p373 = scmp.ne.s32.totalorder %s358, %s372
    %p374 = scmp.eq.s32.totalorder %s33, 0
    %p375 = por %p373, %p374
    %s377 = sadd.s32 %s376, 1
    %p380 = scmp.eq.s32.totalorder %s27, 1
    %p381 = scmp.ne.s32.totalorder %s376, %s378
    %p382 = scmp.eq.s32.totalorder %s27, 0
    %p383 = por %p381, %p382
    %p384 = scmp.ne.s32.totalorder %s376, %s378
    %p385 = scmp.eq.s32.totalorder %s32, 1
    %p386 = por %p384, %p385
    %p387 = scmp.ne.s32.totalorder %s378, %s379
    %p388 = scmp.eq.s32.totalorder %s32, 0
    %p389 = por %p387, %p388
    %p390 = scmp.ne.s32.totalorder %s378, %s379
    %p391 = scmp.eq.s32.totalorder %s33, 1
    %p392 = por %p390, %p391
    %p394 = scmp.ne.s32.totalorder %s379, %s393
    %p395 = scmp.eq.s32.totalorder %s33, 0
    %p396 = por %p394, %p395
    %s398 = sadd.s32 %s397, 1
    %p401 = scmp.eq.s32.totalorder %s27, 1
    %p402 = scmp.ne.s32.totalorder %s397, %s399
    %p403 = scmp.eq.s32.totalorder %s27, 0
    %p404 = por %p402, %p403
    %p405 = scmp.ne.s32.totalorder %s397, %s399
    %p406 = scmp.eq.s32.totalorder %s32, 1
    %p407 = por %p405, %p406
    %p408 = scmp.ne.s32.totalorder %s399, %s400
    %p409 = scmp.eq.s32.totalorder %s32, 0
    %p410 = por %p408, %p409
    %p411 = scmp.ne.s32.totalorder %s399, %s400
    %p412 = scmp.eq.s32.totalorder %s33, 1
    %p413 = por %p411, %p412
    %p415 = scmp.ne.s32.totalorder %s400, %s414
    %p416 = scmp.eq.s32.totalorder %s33, 0
    %p417 = por %p415, %p416
    %s419 = sadd.s32 %s418, 1
    %p422 = scmp.eq.s32.totalorder %s27, 1
    %p423 = scmp.ne.s32.totalorder %s418, %s420
    %p424 = scmp.eq.s32.totalorder %s27, 0
    %p425 = por %p423, %p424
    %p426 = scmp.ne.s32.totalorder %s418, %s420
    %p427 = scmp.eq.s32.totalorder %s32, 1
    %p428 = por %p426, %p427
    %p429 = scmp.ne.s32.totalorder %s420, %s421
    %p430 = scmp.eq.s32.totalorder %s32, 0
    %p431 = por %p429, %p430
    %p432 = scmp.ne.s32.totalorder %s420, %s421
    %p433 = scmp.eq.s32.totalorder %s33, 1
    %p434 = por %p432, %p433
    %p436 = scmp.ne.s32.totalorder %s421, %s435
    %p437 = scmp.eq.s32.totalorder %s33, 0
    %p438 = por %p436, %p437
    %s439 = ssub.s32 %s27, %s34
    %p440 = scmp.eq.s32.totalorder %s439, 0
    %s442 = sadd.s32 %s441, 1
    %s443 = scalar_select %p440, %s441, %s442
    %p446 = pneg %p440
    %p447 = scmp.eq.s32.totalorder %s27, 1
    %p448 = por %p446, %p447
    %p449 = scmp.ne.s32.totalorder %s441, %s444
    %p450 = scmp.eq.s32.totalorder %s27, 0
    %p451 = por %p449, %p450
    %p452 = scmp.ne.s32.totalorder %s441, %s444
    %p453 = scmp.eq.s32.totalorder %s32, 1
    %p454 = por %p452, %p453
    %p455 = scmp.ne.s32.totalorder %s444, %s445
    %p456 = scmp.eq.s32.totalorder %s32, 0
    %p457 = por %p455, %p456
    %p458 = scmp.ne.s32.totalorder %s444, %s445
    %p459 = scmp.eq.s32.totalorder %s33, 1
    %p460 = por %p458, %p459
    %p462 = scmp.ne.s32.totalorder %s445, %s461
    %p463 = scmp.eq.s32.totalorder %s33, 0
    %p464 = por %p462, %p463
    %s465 = ssub.s32 %s27, %s34
    %p466 = scmp.eq.s32.totalorder %s465, 0
    %s468 = sadd.s32 %s467, 1
    %s469 = scalar_select %p466, %s467, %s468
    %p472 = pneg %p466
    %p473 = scmp.eq.s32.totalorder %s27, 1
    %p474 = por %p472, %p473
    %p475 = scmp.ne.s32.totalorder %s467, %s470
    %p476 = scmp.eq.s32.totalorder %s27, 0
    %p477 = por %p475, %p476
    %p478 = scmp.ne.s32.totalorder %s467, %s470
    %p479 = scmp.eq.s32.totalorder %s32, 1
    %p480 = por %p478, %p479
    %p481 = scmp.ne.s32.totalorder %s470, %s471
    %p482 = scmp.eq.s32.totalorder %s32, 0
    %p483 = por %p481, %p482
    %p484 = scmp.ne.s32.totalorder %s470, %s471
    %p485 = scmp.eq.s32.totalorder %s33, 1
    %p486 = por %p484, %p485
    %p488 = scmp.ne.s32.totalorder %s471, %s487
    %p489 = scmp.eq.s32.totalorder %s33, 0
    %p490 = por %p488, %p489
    %p491 = scmp.le.s32.totalorder 1, %s27
    %p492 = scmp.lt.s32.totalorder %s27, 3
    %p493 = pnand %p491, %p492
    %p494 = pneg %p493
    // Predicated region
    $region9: #{_lambda_.1} parent=5 // pred_check
      _
    $region10: #{_lambda_.1} parent=5 // pred_check_branch
      %496 = sbr.rel (%p493) target = $region12
    $region11: #{_lambda_.1} parent=5 // pred_region
      %s497 = ssub.s32 %s27, 1
      // Predicated region
      $region13: #{_lambda_.1} parent=11 // pred_check
        %p498 = pneg %p74
      $region14: #{_lambda_.1} parent=11 // pred_check_branch
        %500 = sbr.rel (%p498) target = $region16
      $region15: #{_lambda_.1} parent=11 // pred_region
        _
      $region16: #{_lambda_.1} parent=11 // pred_fallthru
        _
      // Predicated region
      $region17: #{_lambda_.1} parent=11 // pred_check
        %p501 = pneg %p95
      $region18: #{_lambda_.1} parent=11 // pred_check_branch
        %503 = sbr.rel (%p501) target = $region20
      $region19: #{_lambda_.1} parent=11 // pred_region
        _
      $region20: #{_lambda_.1} parent=11 // pred_fallthru
        _
      // Predicated region
      $region21: #{_lambda_.1} parent=11 // pred_check
        %p504 = pneg %p116
      $region22: #{_lambda_.1} parent=11 // pred_check_branch
        %506 = sbr.rel (%p504) target = $region24
      $region23: #{_lambda_.1} parent=11 // pred_region
        _
      $region24: #{_lambda_.1} parent=11 // pred_fallthru
        _
      // Predicated region
      $region25: #{_lambda_.1} parent=11 // pred_check
        %p507 = pneg %p137
      $region26: #{_lambda_.1} parent=11 // pred_check_branch
        %509 = sbr.rel (%p507) target = $region28
      $region27: #{_lambda_.1} parent=11 // pred_region
        _
      $region28: #{_lambda_.1} parent=11 // pred_fallthru
        _
      // Predicated region
      $region29: #{_lambda_.1} parent=11 // pred_check
        %p510 = pneg %p158
      $region30: #{_lambda_.1} parent=11 // pred_check_branch
        %512 = sbr.rel (%p510) target = $region32
      $region31: #{_lambda_.1} parent=11 // pred_region
        _
      $region32: #{_lambda_.1} parent=11 // pred_fallthru
        _
      // Predicated region
      $region33: #{_lambda_.1} parent=11 // pred_check
        %p513 = pneg %p179
      $region34: #{_lambda_.1} parent=11 // pred_check_branch
        %515 = sbr.rel (%p513) target = $region36
      $region35: #{_lambda_.1} parent=11 // pred_region
        _
      $region36: #{_lambda_.1} parent=11 // pred_fallthru
        _
      // Predicated region
      $region37: #{_lambda_.1} parent=11 // pred_check
        %p516 = pneg %p200
      $region38: #{_lambda_.1} parent=11 // pred_check_branch
        %518 = sbr.rel (%p516) target = $region40
      $region39: #{_lambda_.1} parent=11 // pred_region
        _
      $region40: #{_lambda_.1} parent=11 // pred_fallthru
        _
      // Predicated region
      $region41: #{_lambda_.1} parent=11 // pred_check
        %p519 = pneg %p221
      $region42: #{_lambda_.1} parent=11 // pred_check_branch
        %521 = sbr.rel (%p519) target = $region44
      $region43: #{_lambda_.1} parent=11 // pred_region
        _
      $region44: #{_lambda_.1} parent=11 // pred_fallthru
        _
      // Predicated region
      $region45: #{_lambda_.1} parent=11 // pred_check
        %p522 = pneg %p242
      $region46: #{_lambda_.1} parent=11 // pred_check_branch
        %524 = sbr.rel (%p522) target = $region48
      $region47: #{_lambda_.1} parent=11 // pred_region
        _
      $region48: #{_lambda_.1} parent=11 // pred_fallthru
        _
      // Predicated region
      $region49: #{_lambda_.1} parent=11 // pred_check
        %p525 = pneg %p263
      $region50: #{_lambda_.1} parent=11 // pred_check_branch
        %527 = sbr.rel (%p525) target = $region52
      $region51: #{_lambda_.1} parent=11 // pred_region
        _
      $region52: #{_lambda_.1} parent=11 // pred_fallthru
        _
      // Predicated region
      $region53: #{_lambda_.1} parent=11 // pred_check
        %p528 = pneg %p284
      $region54: #{_lambda_.1} parent=11 // pred_check_branch
        %530 = sbr.rel (%p528) target = $region56
      $region55: #{_lambda_.1} parent=11 // pred_region
        _
      $region56: #{_lambda_.1} parent=11 // pred_fallthru
        _
      // Predicated region
      $region57: #{_lambda_.1} parent=11 // pred_check
        %p531 = pneg %p305
      $region58: #{_lambda_.1} parent=11 // pred_check_branch
        %533 = sbr.rel (%p531) target = $region60
      $region59: #{_lambda_.1} parent=11 // pred_region
        _
      $region60: #{_lambda_.1} parent=11 // pred_fallthru
        _
      // Predicated region
      $region61: #{_lambda_.1} parent=11 // pred_check
        %p534 = pneg %p326
      $region62: #{_lambda_.1} parent=11 // pred_check_branch
        %536 = sbr.rel (%p534) target = $region64
      $region63: #{_lambda_.1} parent=11 // pred_region
        _
      $region64: #{_lambda_.1} parent=11 // pred_fallthru
        _
      // Predicated region
      $region65: #{_lambda_.1} parent=11 // pred_check
        %p537 = pneg %p347
      $region66: #{_lambda_.1} parent=11 // pred_check_branch
        %539 = sbr.rel (%p537) target = $region68
      $region67: #{_lambda_.1} parent=11 // pred_region
        _
      $region68: #{_lambda_.1} parent=11 // pred_fallthru
        _
      // Predicated region
      $region69: #{_lambda_.1} parent=11 // pred_check
        %p540 = pneg %p368
      $region70: #{_lambda_.1} parent=11 // pred_check_branch
        %542 = sbr.rel (%p540) target = $region72
      $region71: #{_lambda_.1} parent=11 // pred_region
        _
      $region72: #{_lambda_.1} parent=11 // pred_fallthru
        _
      // Predicated region
      $region73: #{_lambda_.1} parent=11 // pred_check
        %p543 = pneg %p389
      $region74: #{_lambda_.1} parent=11 // pred_check_branch
        %545 = sbr.rel (%p543) target = $region76
      $region75: #{_lambda_.1} parent=11 // pred_region
        _
      $region76: #{_lambda_.1} parent=11 // pred_fallthru
        _
      // Predicated region
      $region77: #{_lambda_.1} parent=11 // pred_check
        %p546 = pneg %p410
      $region78: #{_lambda_.1} parent=11 // pred_check_branch
        %548 = sbr.rel (%p546) target = $region80
      $region79: #{_lambda_.1} parent=11 // pred_region
        _
      $region80: #{_lambda_.1} parent=11 // pred_fallthru
        _
      // Predicated region
      $region81: #{_lambda_.1} parent=11 // pred_check
        %p549 = pneg %p431
      $region82: #{_lambda_.1} parent=11 // pred_check_branch
        %551 = sbr.rel (%p549) target = $region84
      $region83: #{_lambda_.1} parent=11 // pred_region
        _
      $region84: #{_lambda_.1} parent=11 // pred_fallthru
        _
    $region12: #{_lambda_.1} parent=5 // pred_fallthru
      _
    %p552 = scmp.lt.s32.totalorder %s27, 2
    // Predicated region
    $region85: #{_lambda_.1} parent=5 // pred_check
      %p553 = pneg %p552
    $region86: #{_lambda_.1} parent=5 // pred_check_branch
      %555 = sbr.rel (%p553) target = $region88
    $region87: #{_lambda_.1} parent=5 // pred_region
      // Predicated region
      $region89: #{_lambda_.1} parent=87 // pred_check
        %p556 = pneg %p47
      $region90: #{_lambda_.1} parent=87 // pred_check_branch
        %558 = sbr.rel (%p556) target = $region92
      $region91: #{_lambda_.1} parent=87 // pred_region
        %p559 = scmp.lt.s32.totalorder %s27, 1
        %s560 = scalar_select %p559, %s27, 1
        %s561 = scalar_lea.vmem %s0, %s560
      $region92: #{_lambda_.1} parent=87 // pred_fallthru
        _
    $region88: #{_lambda_.1} parent=5 // pred_fallthru
      _
    %p562 = scmp.le.s32.totalorder 1, %s27
    %p563 = scmp.lt.s32.totalorder %s27, 3
    %p564 = pnand %p562, %p563
    %p565 = pneg %p564
    // Predicated region
    $region93: #{_lambda_.1} parent=5 // pred_check
      _
    $region94: #{_lambda_.1} parent=5 // pred_check_branch
      %567 = sbr.rel (%p564) target = $region96
    $region95: #{_lambda_.1} parent=5 // pred_region
      %s568 = ssub.s32 %s27, 1
      %p569 = scmp.lt.s32.totalorder %s32, 1
      %s570 = scalar_select %p569, %s32, 1
      %s571 = scalar_lea.vmem %s0, %s570
      %p572 = pneg %p53
      %p573 = pneg %p50
      %p574 = pneg %p74
      %p575 = pneg %p71
      %p576 = pneg %p95
      %p577 = pneg %p92
      %p578 = pneg %p116
      %p579 = pneg %p113
      %p580 = pneg %p137
      %p581 = pneg %p134
      %p582 = pneg %p158
      %p583 = pneg %p155
      %p584 = pneg %p179
      %p585 = pneg %p176
      %p586 = pneg %p200
      %p587 = pneg %p197
      %p588 = pneg %p221
      %p589 = pneg %p218
      %p590 = pneg %p242
      %p591 = pneg %p239
      %p592 = pneg %p263
      %p593 = pneg %p260
      %p594 = pneg %p284
      %p595 = pneg %p281
      %p596 = pneg %p305
      %p597 = pneg %p302
      %p598 = pneg %p326
      %p599 = pneg %p323
      %p600 = pneg %p347
      %p601 = pneg %p344
      %p602 = pneg %p368
      %p603 = pneg %p365
      %p604 = pneg %p389
      %p605 = pneg %p386
      %p606 = pneg %p410
      %p607 = pneg %p407
      %p608 = pneg %p431
      %p609 = pneg %p428
      %p610 = pneg %p457
      %p611 = pneg %p454
      %p612 = scmp.lt.s32.totalorder %s32, 1
      %s613 = scalar_select %p612, %s32, 1
      %s614 = smul.addr %s613, 2
      %s615 = smul.addr %s614, 8
      %s616 = scalar_lea.vmem %s19, %s615
      %p617 = pneg %p483
      %p618 = pneg %p480
      %p619 = scmp.lt.s32.totalorder %s32, 1
      %s620 = scalar_select %p619, %s32, 1
      %s621 = smul.addr %s620, 4
      %s622 = smul.addr %s621, 8
      %s623 = scalar_lea.vmem %s20, %s622
      %p624 = scmp.lt.s32.totalorder %s32, 1
      %s625 = scalar_select %p624, %s32, 1
      %s626 = scalar_lea.vmem %s0, %s625
      %p627 = scmp.lt.s32.totalorder %s32, 1
      %s628 = scalar_select %p627, %s32, 1
      %s629 = smul.addr %s628, 2
      %s630 = smul.addr %s629, 8
      %s631 = scalar_lea.vmem %s19, %s630
      %p632 = scmp.lt.s32.totalorder %s32, 1
      %s633 = scalar_select %p632, %s32, 1
      %s634 = smul.addr %s633, 4
      %s635 = smul.addr %s634, 8
      %s636 = scalar_lea.vmem %s20, %s635
      %v638 = vld [vmem:[%s626] sm:$0x1]
      %v640 = vperm.slane %v638, 0
      %641 = vrot.lane.b32.xlu0 %v640, 3
      %v642 = vpop.permute.xlu0 %641
      %vm644 = vcmask 540696
      %645 = vst.msk [vmem:[#allocation2] sm:$0x1] %vm644, %v642
      %646 = vrot.lane.b32.xlu0 %v640, 125
      %v647 = vpop.permute.xlu0 %646
      %vm649 = vcmask 0
      %650 = vst.msk [vmem:[#allocation2] sm:$0x1] %vm649, %v647
      %651 = vrot.lane.b32.xlu0 %v640, 127
      %v652 = vpop.permute.xlu0 %651
      %vm654 = vcmask 8200
      %655 = vst.msk [vmem:[#allocation2] sm:$0x1] %vm654, %v652
      %656 = vrot.lane.b32.xlu0 %v640, 1
      %v657 = vpop.permute.xlu0 %656
      %vm659 = vcmask 16400
      %660 = vst.msk [vmem:[#allocation2] sm:$0x1] %vm659, %v657
      %661 = vrot.lane.b32.xlu0 %v640, 5
      %v662 = vpop.permute.xlu0 %661
      %vm664 = vcmask 549400
      %665 = vst.msk [vmem:[#allocation2] sm:$0x1] %vm664, %v662
      %666 = vrot.lane.b32.xlu0 %v640, 7
      %v667 = vpop.permute.xlu0 %666
      %vm669 = vcmask 557600
      %670 = vst.msk [vmem:[#allocation2] sm:$0x1] %vm669, %v667
      %671 = vrot.lane.b32.xlu0 %v640, 9
      %v672 = vpop.permute.xlu0 %671
      %vm674 = vcmask 565800
      %675 = vst.msk [vmem:[#allocation2] sm:$0x1] %vm674, %v672
      %v676 = vld [vmem:[#allocation2] sm:$0x1]
      %vm677 = vcmask 516096
      %678 = vst.msk [vmem:[#allocation3] sm:$0x1] %vm677, %v676
      %v679 = vld [vmem:[#allocation2] sm:$0x1]
      %v681 = vperm.slane %v679, 0
      %682 = vrot.lane.b32.xlu0 %v681, 127
      %v683 = vpop.permute.xlu0 %682
      %685 = vst.msk [vmem:[#allocation3 + $0x1] sm:$0x1] %vm677, %v683
      %v686 = vld [vmem:[#allocation2] sm:$0x1]
      %v688 = vperm.slane %v686, 0
      %689 = vrot.lane.b32.xlu0 %v688, 126
      %v690 = vpop.permute.xlu0 %689
      %692 = vst.msk [vmem:[#allocation3 + $0x2] sm:$0x1] %vm677, %v690
      %v693 = vld [vmem:[#allocation2] sm:$0x1]
      %v695 = vperm.slane %v693, 0
      %696 = vrot.lane.b32.xlu0 %v695, 125
      %v697 = vpop.permute.xlu0 %696
      %699 = vst.msk [vmem:[#allocation3 + $0x3] sm:$0x1] %vm677, %v697
      %v700 = vld [vmem:[#allocation2] sm:$0x1]
      %v702 = vperm.slane %v700, 0
      %703 = vrot.lane.b32.xlu0 %v702, 124
      %v704 = vpop.permute.xlu0 %703
      %706 = vst.msk [vmem:[#allocation3 + $0x4] sm:$0x1] %vm677, %v704
      %v707 = vld [vmem:[#allocation2] sm:$0x1]
      %v709 = vperm.slane %v707, 0
      %710 = vrot.lane.b32.xlu0 %v709, 123
      %v711 = vpop.permute.xlu0 %710
      %713 = vst.msk [vmem:[#allocation3 + $0x5] sm:$0x1] %vm677, %v711
      %v714 = vld [vmem:[#allocation2] sm:$0x1]
      %v716 = vperm.slane %v714, 0
      %717 = vrot.lane.b32.xlu0 %v716, 122
      %v718 = vpop.permute.xlu0 %717
      %720 = vst.msk [vmem:[#allocation3 + $0x6] sm:$0x1] %vm677, %v718
      %v721 = vld [vmem:[%s1] sm:$0x3]
      %v722 = vld [vmem:[#allocation3] sm:$0x7f]
      %v723 = vpack.c.bf16 %v722, %v722
      %v724 = vld [vmem:[%s2] sm:$0xf]
      %726 = vset.pattern.permute.xlu0 0
      %727 = vperm.xlu0 %726, %v724
      %v728 = vpop.permute.xlu0 %727
      %vm730 = vcmask 56320
      %v732 = vsel %vm730, %v721, 0
      %vm734 = vcmask 1042432
      %vm735 = vcmask 1043456
      %v736 = vsel %vm734, 4294967295, 65535
      %v737 = vsel %vm735, %v736, 0
      %v739 = vand.u32 %v723, %v737
      %741 = vmatpush.bf16.msra.mxu0 0
      %742 = vmatpush.bf16.msra.mxu0 0
      %743 = vmatpush.bf16.msra.mxu0 0
      %744 = vmatpush.bf16.msra.mxu0 0
      %745 = vmatpush.bf16.msra.mxu0 0
      %746 = vmatpush.bf16.msra.mxu0 0
      %747 = vmatpush.bf16.msra.mxu0 0
      %748 = vmatpush.bf16.msra.mxu0 %v739
      %749 = vmatmul.bf16.gmra.mxu0 %v732
      %v750 = vpop.f32.mrf.mxu0
      %v751 = vadd.f32 %v728, %v750
      %v752 = vpop.f32.mrf.mxu0
      %753 = vdwg.mxu0
      %vm754 = vcmp.gt.f32.partialorder %v751, 0.0
      %v755 = vmin.f32 %v751, 0.0
      %v756 = vmul.f32 %v755, 1.442695
      %v757 = vpow.pop %v756
      %v758 = vsub.f32 %v757, 1.0
      %v759 = vsel %vm754, %v751, %v758
      %761 = vrot.lane.b32.xlu0 %v759, 1
      %v762 = vpop.permute.xlu0 %761
      %vm764 = vcmask 527368
      %765 = vst.msk [vmem:[#allocation4] sm:$0xf] %vm764, %v762
      %766 = vrot.lane.b32.xlu0 %v759, 127
      %v767 = vpop.permute.xlu0 %766
      %vm769 = vcmask 3072
      %770 = vst.msk [vmem:[#allocation4] sm:$0xf] %vm769, %v767
      %771 = vrot.lane.b32.xlu0 %v759, 3
      %v772 = vpop.permute.xlu0 %771
      %vm774 = vcmask 536072
      %775 = vst.msk [vmem:[#allocation4] sm:$0xf] %vm774, %v772
      %v776 = vld [vmem:[#allocation4] sm:$0xf]
      %vm777 = vcmask 519168
      %778 = vst.msk [vmem:[#allocation5] sm:$0xf] %vm777, %v776
      %v779 = vld [vmem:[#allocation4] sm:$0xf]
      %781 = vrot.lane.b32.xlu0 %v779, 127
      %v782 = vpop.permute.xlu0 %781
      %784 = vst.msk [vmem:[#allocation5 + $0x4] sm:$0xf] %vm777, %v782
      %v785 = vld [vmem:[#allocation4] sm:$0xf]
      %787 = vrot.lane.b32.xlu0 %v785, 126
      %v788 = vpop.permute.xlu0 %787
      %790 = vst.msk [vmem:[#allocation5 + $0x8] sm:$0xf] %vm777, %v788
      %v791 = vld [vmem:[%s3] sm:$0x1]
      %v792 = vld [vmem:[#allocation5] sm:$0xff]
      %v793 = vld [vmem:[#allocation5 + $0x8] sm:$0xf]
      %v794 = vpack.c.bf16 %v793, %v792
      %v795 = vld [vmem:[%s4] sm:$0x3]
      %797 = vset.pattern.permute.xlu0 0
      %798 = vperm.xlu0 %797, %v795
      %v799 = vpop.permute.xlu0 %798
      %vm801 = vcmask 97280
      %v803 = vsel %vm801, %v791, 0
      %vm805 = vcmask 1045504
      %v807 = vsel %vm805, %v794, 0
      %809 = vmatpush.bf16.msra.mxu0 0
      %810 = vmatpush.bf16.msra.mxu0 0
      %811 = vmatpush.bf16.msra.mxu0 0
      %812 = vmatpush.bf16.msra.mxu0 0
      %813 = vmatpush.bf16.msra.mxu0 0
      %814 = vmatpush.bf16.msra.mxu0 0
      %815 = vmatpush.bf16.msra.mxu0 0
      %816 = vmatpush.bf16.msra.mxu0 %v807
      %817 = vmatmul.bf16.gmra.mxu0 %v803
      %v818 = vpop.f32.mrf.mxu0
      %v819 = vadd.f32 %v799, %v818
      %v820 = vpop.f32.mrf.mxu0
      %821 = vdwg.mxu0
      %vm822 = vcmp.gt.f32.partialorder %v819, 0.0
      %v823 = vmin.f32 %v819, 0.0
      %v824 = vmul.f32 %v823, 1.442695
      %v825 = vpow.pop %v824
      %v826 = vsub.f32 %v825, 1.0
      %v827 = vsel %vm822, %v819, %v826
      %v828 = vld [vmem:[%s5] sm:$0x3]
      %v829 = vpack.c.bf16 %v827, %v827
      %v830 = vld [vmem:[%s6] sm:$0xf]
      %832 = vset.pattern.permute.xlu0 0
      %833 = vperm.xlu0 %832, %v830
      %v834 = vpop.permute.xlu0 %833
      %vm836 = vcmask 15360
      %v838 = vsel %vm836, %v828, 0
      %vm840 = vcmask 1040384
      %v842 = vsel %vm840, %v829, 0
      %844 = vmatpush.bf16.msra.mxu0 0
      %845 = vmatpush.bf16.msra.mxu0 0
      %846 = vmatpush.bf16.msra.mxu0 0
      %847 = vmatpush.bf16.msra.mxu0 0
      %848 = vmatpush.bf16.msra.mxu0 0
      %849 = vmatpush.bf16.msra.mxu0 0
      %850 = vmatpush.bf16.msra.mxu0 0
      %851 = vmatpush.bf16.msra.mxu0 %v842
      %852 = vmatmul.bf16.gmra.mxu0 %v838
      %v853 = vpop.f32.mrf.mxu0
      %v854 = vadd.f32 %v834, %v853
      %v855 = vpop.f32.mrf.mxu0
      %856 = vdwg.mxu0
      %v857 = vadd.f32 %v854, %v751
      %vm858 = vcmp.gt.f32.partialorder %v857, 0.0
      %v859 = vmin.f32 %v857, 0.0
      %v860 = vmul.f32 %v859, 1.442695
      %v861 = vpow.pop %v860
      %v862 = vsub.f32 %v861, 1.0
      %v863 = vsel %vm858, %v857, %v862
      %865 = vrot.lane.b32.xlu0 %v863, 1
      %v866 = vpop.permute.xlu0 %865
      %868 = vst.msk [vmem:[#allocation6] sm:$0xf] %vm764, %v866
      %869 = vrot.lane.b32.xlu0 %v863, 127
      %v870 = vpop.permute.xlu0 %869
      %872 = vst.msk [vmem:[#allocation6] sm:$0xf] %vm769, %v870
      %873 = vrot.lane.b32.xlu0 %v863, 3
      %v874 = vpop.permute.xlu0 %873
      %876 = vst.msk [vmem:[#allocation6] sm:$0xf] %vm774, %v874
      %v877 = vld [vmem:[#allocation6] sm:$0xf]
      %v878 = vld [vmem:[%s7] sm:$0xf]
      %v879 = vpack.c.bf16 %v877, %v877
      %v881 = vunpack.c.l.b16 %v878
      %v882 = vpack.c.b16 %v881, %v881
      %883 = vrot.lane.b32.xlu0 %v882, 124
      %v884 = vpop.permute.xlu0 %883
      %886 = vrot.lane.b32.xlu0 %v879, 127
      %v887 = vpop.permute.xlu0 %886
      %vm888 = vcmask 31744
      %v890 = vsel %vm888, %v884, 0
      %vm892 = vcmask 1041408
      %v894 = vsel %vm892, %v887, 0
      %896 = vmatpush.bf16.msra.mxu0 0
      %897 = vmatpush.bf16.msra.mxu0 0
      %898 = vmatpush.bf16.msra.mxu0 0
      %899 = vmatpush.bf16.msra.mxu0 0
      %900 = vmatpush.bf16.msra.mxu0 0
      %901 = vmatpush.bf16.msra.mxu0 0
      %902 = vmatpush.bf16.msra.mxu0 0
      %903 = vmatpush.bf16.msra.mxu0 %v894
      %904 = vmatmul.bf16.gmra.mxu0 %v890
      %v905 = vpop.f32.mrf.mxu0
      %v906 = vadd.f32 0.0, %v905
      %v907 = vpop.f32.mrf.mxu0
      %908 = vdwg.mxu0
      %v910 = vsel %vm888, %v878, 0
      %v913 = vsel %vm892, %v879, 0
      %915 = vmatpush.bf16.msra.mxu0 0
      %916 = vmatpush.bf16.msra.mxu0 0
      %917 = vmatpush.bf16.msra.mxu0 0
      %918 = vmatpush.bf16.msra.mxu0 0
      %919 = vmatpush.bf16.msra.mxu0 0
      %920 = vmatpush.bf16.msra.mxu0 0
      %921 = vmatpush.bf16.msra.mxu0 0
      %922 = vmatpush.bf16.msra.mxu0 %v913
      %923 = vmatmul.bf16.gmra.mxu0 %v910
      %v924 = vpop.f32.mrf.mxu0
      %v925 = vadd.f32 %v906, %v924
      %v926 = vpop.f32.mrf.mxu0
      %927 = vdwg.mxu0
      %928 = vrot.lane.b32.xlu0 %v882, 120
      %v929 = vpop.permute.xlu0 %928
      %930 = vrot.lane.b32.xlu0 %v879, 126
      %v931 = vpop.permute.xlu0 %930
      %v933 = vsel %vm888, %v929, 0
      %v936 = vsel %vm892, %v931, 0
      %938 = vmatpush.bf16.msra.mxu0 0
      %939 = vmatpush.bf16.msra.mxu0 0
      %940 = vmatpush.bf16.msra.mxu0 0
      %941 = vmatpush.bf16.msra.mxu0 0
      %942 = vmatpush.bf16.msra.mxu0 0
      %943 = vmatpush.bf16.msra.mxu0 0
      %944 = vmatpush.bf16.msra.mxu0 0
      %945 = vmatpush.bf16.msra.mxu0 %v936
      %946 = vmatmul.bf16.gmra.mxu0 %v933
      %v947 = vpop.f32.mrf.mxu0
      %v948 = vadd.f32 0.0, %v947
      %v949 = vpop.f32.mrf.mxu0
      %950 = vdwg.mxu0
      %v951 = vadd.f32 %v925, %v948
      %952 = vrot.lane.b32.xlu0 %v882, 116
      %v953 = vpop.permute.xlu0 %952
      %954 = vrot.lane.b32.xlu0 %v879, 125
      %v955 = vpop.permute.xlu0 %954
      %v957 = vsel %vm888, %v953, 0
      %v960 = vsel %vm892, %v955, 0
      %962 = vmatpush.bf16.msra.mxu0 0
      %963 = vmatpush.bf16.msra.mxu0 0
      %964 = vmatpush.bf16.msra.mxu0 0
      %965 = vmatpush.bf16.msra.mxu0 0
      %966 = vmatpush.bf16.msra.mxu0 0
      %967 = vmatpush.bf16.msra.mxu0 0
      %968 = vmatpush.bf16.msra.mxu0 0
      %969 = vmatpush.bf16.msra.mxu0 %v960
      %970 = vmatmul.bf16.gmra.mxu0 %v957
      %v971 = vpop.f32.mrf.mxu0
      %v972 = vadd.f32 0.0, %v971
      %v973 = vpop.f32.mrf.mxu0
      %974 = vdwg.mxu0
      %v975 = vadd.f32 %v951, %v972
      %v976 = vpack.c.bf16 %v975, %v975
      %v977 = vlaneseq
      %v978 = vshrl.u32 %v977, 7
      %v979 = vadd.s32 %v978, 8
      %v980 = vadd.s32 %v978, 16
      %v981 = vadd.s32 %v978, 24
      %v982 = vadd.s32 %v978, 32
      %v983 = vadd.s32 %v978, 40
      %v984 = vadd.s32 %v978, 48
      %v985 = vadd.s32 %v978, 56
      %v986 = vlaneseq
      %v987 = vand.u32 %v986, 127
      %v988 = vmul.u32 %v987, 2
      %vm989 = vcmp.eq.s32.totalorder %v978, %v988
      %vm990 = vcmp.eq.s32.totalorder %v979, %v988
      %vm991 = vcmp.eq.s32.totalorder %v980, %v988
      %vm992 = vcmp.eq.s32.totalorder %v981, %v988
      %vm993 = vcmp.eq.s32.totalorder %v982, %v988
      %vm994 = vcmp.eq.s32.totalorder %v983, %v988
      %vm995 = vcmp.eq.s32.totalorder %v984, %v988
      %vm996 = vcmp.eq.s32.totalorder %v985, %v988
      %v997 = vsel %vm989, 1, 0
      %v998 = vsel %vm990, 1, 0
      %v999 = vsel %vm991, 1, 0
      %v1000 = vsel %vm992, 1, 0
      %v1001 = vsel %vm993, 1, 0
      %v1002 = vsel %vm994, 1, 0
      %v1003 = vsel %vm995, 1, 0
      %v1004 = vsel %vm996, 1, 0
      %v1005 = vcvt.s32.f32 %v997
      %v1006 = vcvt.s32.f32 %v998
      %v1007 = vcvt.s32.f32 %v999
      %v1008 = vcvt.s32.f32 %v1000
      %v1009 = vcvt.s32.f32 %v1001
      %v1010 = vcvt.s32.f32 %v1002
      %v1011 = vcvt.s32.f32 %v1003
      %v1012 = vcvt.s32.f32 %v1004
      %v1013 = vpack.c.bf16 %v1006, %v1005
      %v1014 = vpack.c.bf16 %v1008, %v1007
      %v1015 = vpack.c.bf16 %v1010, %v1009
      %v1016 = vpack.c.bf16 %v1012, %v1011
      %v1017 = vld [vmem:[%s8] sm:$0xff]
      %1019 = vset.pattern.permute.xlu0 0
      %1020 = vperm.xlu0 %1019, %v1017
      %v1021 = vpop.permute.xlu0 %1020
      %vm1023 = vcmask 515072
      %v1025 = vsel %vm1023, %v976, 0
      %vm1027 = vcmask 1046528
      %vm1028 = vcmask 1047552
      %v1029 = vsel %vm1027, 4294967295, 65535
      %v1030 = vsel %vm1028, %v1029, 0
      %v1032 = vand.u32 %v1016, %v1030
      %1034 = vmatpush.bf16.msra.mxu0 0
      %1035 = vmatpush.bf16.msra.mxu0 0
      %1036 = vmatpush.bf16.msra.mxu0 0
      %1037 = vmatpush.bf16.msra.mxu0 0
      %1038 = vmatpush.bf16.msra.mxu0 %v1032
      %1039 = vmatpush.bf16.msra.mxu0 %v1015
      %1040 = vmatpush.bf16.msra.mxu0 %v1014
      %1041 = vmatpush.bf16.msra.mxu0 %v1013
      %1042 = vmatmul.bf16.gmra.mxu0 %v1025
      %v1043 = vpop.f32.mrf.mxu0
      %v1044 = vadd.f32 %v1021, %v1043
      %v1045 = vpop.f32.mrf.mxu0
      %1046 = vdwg.mxu0
      %vm1047 = vcmask 261120
      %1048 = vst.msk [vmem:[#allocation7] sm:$0xff] %vm1047, %v1044
      %v1049 = vld [vmem:[#allocation7] sm:$0xff]
      %vm1050 = vcmp.gt.f32.partialorder %v1049, 0.0
      %v1051 = vmin.f32 %v1049, 0.0
      %v1052 = vmul.f32 %v1051, 1.442695
      %v1053 = vpow.pop %v1052
      %v1054 = vsub.f32 %v1053, 1.0
      %v1055 = vsel %vm1050, %v1049, %v1054
      %1057 = vrot.lane.b32.xlu0 %v1055, 1
      %v1058 = vpop.permute.xlu0 %1057
      %vm1060 = vcmask 269320
      %1061 = vst.msk [vmem:[#allocation8] sm:$0xff] %vm1060, %v1058
      %1062 = vrot.lane.b32.xlu0 %v1055, 127
      %v1063 = vpop.permute.xlu0 %1062
      %vm1065 = vcmask 7168
      %1066 = vst.msk [vmem:[#allocation8] sm:$0xff] %vm1065, %v1063
      %1067 = vrot.lane.b32.xlu0 %v1055, 3
      %v1068 = vpop.permute.xlu0 %1067
      %vm1070 = vcmask 277768
      %1071 = vst.msk [vmem:[#allocation8] sm:$0xff] %vm1070, %v1068
      %v1072 = vld [vmem:[#allocation8] sm:$0xff]
      %1073 = vst.msk [vmem:[#allocation9] sm:$0xff] %vm1047, %v1072
      %v1074 = vld [vmem:[#allocation8] sm:$0xff]
      %1076 = vrot.lane.b32.xlu0 %v1074, 127
      %v1077 = vpop.permute.xlu0 %1076
      %1079 = vst.msk [vmem:[#allocation9 + $0x8] sm:$0xff] %vm1047, %v1077
      %v1080 = vld [vmem:[#allocation8] sm:$0xff]
      %1082 = vrot.lane.b32.xlu0 %v1080, 126
      %v1083 = vpop.permute.xlu0 %1082
      %1085 = vst.msk [vmem:[#allocation9 + $0x10] sm:$0xff] %vm1047, %v1083
      %v1086 = vld [vmem:[%s9] sm:$0x3]
      %v1087 = vld [vmem:[#allocation9] sm:$0xff]
      %v1088 = vld [vmem:[#allocation9 + $0x8] sm:$0xff]
      %v1089 = vld [vmem:[#allocation9 + $0x10] sm:$0xff]
      %v1090 = vpack.c.bf16 %v1088, %v1087
      %v1091 = vpack.c.bf16 %v1089, %v1089
      %v1092 = vld [vmem:[%s10] sm:$0xf]
      %1094 = vset.pattern.permute.xlu0 0
      %1095 = vperm.xlu0 %1094, %v1092
      %v1096 = vpop.permute.xlu0 %1095
      %vm1098 = vcmask 195584
      %v1100 = vsel %vm1098, %v1086, 0
      %v1103 = vsel %vm735, %v1091, 0
      %1105 = vmatpush.bf16.msra.mxu0 0
      %1106 = vmatpush.bf16.msra.mxu0 0
      %1107 = vmatpush.bf16.msra.mxu0 0
      %1108 = vmatpush.bf16.msra.mxu0 0
      %1109 = vmatpush.bf16.msra.mxu0 0
      %1110 = vmatpush.bf16.msra.mxu0 0
      %1111 = vmatpush.bf16.msra.mxu0 %v1103
      %1112 = vmatpush.bf16.msra.mxu0 %v1090
      %1113 = vmatmul.bf16.gmra.mxu0 %v1100
      %v1114 = vpop.f32.mrf.mxu0
      %v1115 = vadd.f32 %v1096, %v1114
      %v1116 = vpop.f32.mrf.mxu0
      %1117 = vdwg.mxu0
      %vm1118 = vcmp.gt.f32.partialorder %v1115, 0.0
      %v1119 = vmin.f32 %v1115, 0.0
      %v1120 = vmul.f32 %v1119, 1.442695
      %v1121 = vpow.pop %v1120
      %v1122 = vsub.f32 %v1121, 1.0
      %v1123 = vsel %vm1118, %v1115, %v1122
      %v1124 = vld [vmem:[%s11] sm:$0xf]
      %v1125 = vpack.c.bf16 %v1123, %v1123
      %v1126 = vld [vmem:[%s12] sm:$0xff]
      %1128 = vset.pattern.permute.xlu0 0
      %1129 = vperm.xlu0 %1128, %v1126
      %v1130 = vpop.permute.xlu0 %1129
      %v1133 = vsel %vm888, %v1124, 0
      %v1136 = vsel %vm892, %v1125, 0
      %1138 = vmatpush.bf16.msra.mxu0 0
      %1139 = vmatpush.bf16.msra.mxu0 0
      %1140 = vmatpush.bf16.msra.mxu0 0
      %1141 = vmatpush.bf16.msra.mxu0 0
      %1142 = vmatpush.bf16.msra.mxu0 0
      %1143 = vmatpush.bf16.msra.mxu0 0
      %1144 = vmatpush.bf16.msra.mxu0 0
      %1145 = vmatpush.bf16.msra.mxu0 %v1136
      %1146 = vmatmul.bf16.gmra.mxu0 %v1133
      %v1147 = vpop.f32.mrf.mxu0
      %v1148 = vadd.f32 %v1130, %v1147
      %v1149 = vpop.f32.mrf.mxu0
      %1150 = vdwg.mxu0
      %v1151 = vadd.f32 %v1148, %v1049
      %vm1152 = vcmp.gt.f32.partialorder %v1151, 0.0
      %v1153 = vmin.f32 %v1151, 0.0
      %v1154 = vmul.f32 %v1153, 1.442695
      %v1155 = vpow.pop %v1154
      %v1156 = vsub.f32 %v1155, 1.0
      %v1157 = vsel %vm1152, %v1151, %v1156
      %1159 = vrot.lane.b32.xlu0 %v1157, 2
      %v1160 = vpop.permute.xlu0 %1159
      %vm1162 = vcmask 277520
      %1163 = vst.msk [vmem:[#allocation10] sm:$0xff] %vm1162, %v1160
      %1164 = vrot.lane.b32.xlu0 %v1157, 126
      %v1165 = vpop.permute.xlu0 %1164
      %1167 = vst.msk [vmem:[#allocation10] sm:$0xff] %vm1065, %v1165
      %vm1168 = vcmask 15368
      %1169 = vst.msk [vmem:[#allocation10] sm:$0xff] %vm1168, %v1157
      %1170 = vrot.lane.b32.xlu0 %v1157, 4
      %v1171 = vpop.permute.xlu0 %1170
      %vm1173 = vcmask 285968
      %1174 = vst.msk [vmem:[#allocation10] sm:$0xff] %vm1173, %v1171
      %1175 = vrot.lane.b32.xlu0 %v1157, 6
      %v1176 = vpop.permute.xlu0 %1175
      %vm1178 = vcmask 294168
      %1179 = vst.msk [vmem:[#allocation10] sm:$0xff] %vm1178, %v1176
      %v1180 = vld [vmem:[#allocation10] sm:$0xff]
      %v1181 = vld [vmem:[%s13] sm:$0xf]
      %v1182 = vld [vmem:[%s13 + $0x4] sm:$0xf]
      %v1183 = vpack.c.bf16 %v1180, %v1180
      %v1186 = vunpack.c.l.b16 %v1181
      %v1187 = vunpack.c.l.b16 %v1182
      %v1188 = vpack.c.b16 %v1187, %v1186
      %1189 = vrot.lane.b32.xlu0 %v1188, 120
      %v1190 = vpop.permute.xlu0 %1189
      %1192 = vrot.lane.b32.xlu0 %v1183, 127
      %v1193 = vpop.permute.xlu0 %1192
      %vm1194 = vcmask 64512
      %v1196 = vsel %vm1194, %v1190, 0
      %v1199 = vsel %vm735, %v1193, 0
      %1201 = vmatpush.bf16.msra.mxu0 0
      %1202 = vmatpush.bf16.msra.mxu0 0
      %1203 = vmatpush.bf16.msra.mxu0 0
      %1204 = vmatpush.bf16.msra.mxu0 0
      %1205 = vmatpush.bf16.msra.mxu0 0
      %1206 = vmatpush.bf16.msra.mxu0 0
      %1207 = vmatpush.bf16.msra.mxu0 0
      %1208 = vmatpush.bf16.msra.mxu0 %v1199
      %1209 = vmatmul.bf16.gmra.mxu0 %v1196
      %v1210 = vpop.f32.mrf.mxu0
      %v1211 = vadd.f32 0.0, %v1210
      %v1212 = vpop.f32.mrf.mxu0
      %v1213 = vadd.f32 0.0, %v1212
      %1214 = vdwg.mxu0
      %v1216 = vsel %vm1194, %v1188, 0
      %v1219 = vsel %vm735, %v1183, 0
      %1221 = vmatpush.bf16.msra.mxu0 0
      %1222 = vmatpush.bf16.msra.mxu0 0
      %1223 = vmatpush.bf16.msra.mxu0 0
      %1224 = vmatpush.bf16.msra.mxu0 0
      %1225 = vmatpush.bf16.msra.mxu0 0
      %1226 = vmatpush.bf16.msra.mxu0 0
      %1227 = vmatpush.bf16.msra.mxu0 0
      %1228 = vmatpush.bf16.msra.mxu0 %v1219
      %1229 = vmatmul.bf16.gmra.mxu0 %v1216
      %v1230 = vpop.f32.mrf.mxu0
      %v1231 = vadd.f32 %v1211, %v1230
      %v1232 = vpop.f32.mrf.mxu0
      %v1233 = vadd.f32 %v1213, %v1232
      %1234 = vdwg.mxu0
      %1235 = vrot.lane.b32.xlu0 %v1188, 112
      %v1236 = vpop.permute.xlu0 %1235
      %1237 = vrot.lane.b32.xlu0 %v1183, 126
      %v1238 = vpop.permute.xlu0 %1237
      %v1240 = vsel %vm1194, %v1236, 0
      %v1243 = vsel %vm735, %v1238, 0
      %1245 = vmatpush.bf16.msra.mxu0 0
      %1246 = vmatpush.bf16.msra.mxu0 0
      %1247 = vmatpush.bf16.msra.mxu0 0
      %1248 = vmatpush.bf16.msra.mxu0 0
      %1249 = vmatpush.bf16.msra.mxu0 0
      %1250 = vmatpush.bf16.msra.mxu0 0
      %1251 = vmatpush.bf16.msra.mxu0 0
      %1252 = vmatpush.bf16.msra.mxu0 %v1243
      %1253 = vmatmul.bf16.gmra.mxu0 %v1240
      %v1254 = vpop.f32.mrf.mxu0
      %v1255 = vadd.f32 0.0, %v1254
      %v1256 = vpop.f32.mrf.mxu0
      %v1257 = vadd.f32 0.0, %v1256
      %1258 = vdwg.mxu0
      %v1259 = vadd.f32 %v1231, %v1255
      %v1260 = vadd.f32 %v1233, %v1257
      %1261 = vrot.lane.b32.xlu0 %v1188, 104
      %v1262 = vpop.permute.xlu0 %1261
      %1263 = vrot.lane.b32.xlu0 %v1183, 125
      %v1264 = vpop.permute.xlu0 %1263
      %v1266 = vsel %vm1194, %v1262, 0
      %v1269 = vsel %vm735, %v1264, 0
      %1271 = vmatpush.bf16.msra.mxu0 0
      %1272 = vmatpush.bf16.msra.mxu0 0
      %1273 = vmatpush.bf16.msra.mxu0 0
      %1274 = vmatpush.bf16.msra.mxu0 0
      %1275 = vmatpush.bf16.msra.mxu0 0
      %1276 = vmatpush.bf16.msra.mxu0 0
      %1277 = vmatpush.bf16.msra.mxu0 0
      %1278 = vmatpush.bf16.msra.mxu0 %v1269
      %1279 = vmatmul.bf16.gmra.mxu0 %v1266
      %v1280 = vpop.f32.mrf.mxu0
      %v1281 = vadd.f32 0.0, %v1280
      %v1282 = vpop.f32.mrf.mxu0
      %v1283 = vadd.f32 0.0, %v1282
      %1284 = vdwg.mxu0
      %v1285 = vadd.f32 %v1259, %v1281
      %v1286 = vadd.f32 %v1260, %v1283
      %1287 = vrot.lane.b32.xlu0 %v1188, 96
      %v1288 = vpop.permute.xlu0 %1287
      %1289 = vrot.lane.b32.xlu0 %v1183, 124
      %v1290 = vpop.permute.xlu0 %1289
      %v1292 = vsel %vm1194, %v1288, 0
      %v1295 = vsel %vm735, %v1290, 0
      %1297 = vmatpush.bf16.msra.mxu0 0
      %1298 = vmatpush.bf16.msra.mxu0 0
      %1299 = vmatpush.bf16.msra.mxu0 0
      %1300 = vmatpush.bf16.msra.mxu0 0
      %1301 = vmatpush.bf16.msra.mxu0 0
      %1302 = vmatpush.bf16.msra.mxu0 0
      %1303 = vmatpush.bf16.msra.mxu0 0
      %1304 = vmatpush.bf16.msra.mxu0 %v1295
      %1305 = vmatmul.bf16.gmra.mxu0 %v1292
      %v1306 = vpop.f32.mrf.mxu0
      %v1307 = vadd.f32 0.0, %v1306
      %v1308 = vpop.f32.mrf.mxu0
      %v1309 = vadd.f32 0.0, %v1308
      %1310 = vdwg.mxu0
      %v1311 = vadd.f32 %v1285, %v1307
      %v1312 = vadd.f32 %v1286, %v1309
      %1313 = vrot.lane.b32.xlu0 %v1188, 88
      %v1314 = vpop.permute.xlu0 %1313
      %1315 = vrot.lane.b32.xlu0 %v1183, 123
      %v1316 = vpop.permute.xlu0 %1315
      %v1318 = vsel %vm1194, %v1314, 0
      %v1321 = vsel %vm735, %v1316, 0
      %1323 = vmatpush.bf16.msra.mxu0 0
      %1324 = vmatpush.bf16.msra.mxu0 0
      %1325 = vmatpush.bf16.msra.mxu0 0
      %1326 = vmatpush.bf16.msra.mxu0 0
      %1327 = vmatpush.bf16.msra.mxu0 0
      %1328 = vmatpush.bf16.msra.mxu0 0
      %1329 = vmatpush.bf16.msra.mxu0 0
      %1330 = vmatpush.bf16.msra.mxu0 %v1321
      %1331 = vmatmul.bf16.gmra.mxu0 %v1318
      %v1332 = vpop.f32.mrf.mxu0
      %v1333 = vadd.f32 0.0, %v1332
      %v1334 = vpop.f32.mrf.mxu0
      %v1335 = vadd.f32 0.0, %v1334
      %1336 = vdwg.mxu0
      %v1337 = vadd.f32 %v1311, %v1333
      %v1338 = vadd.f32 %v1312, %v1335
      %1339 = vrot.lane.b32.xlu0 %v1188, 80
      %v1340 = vpop.permute.xlu0 %1339
      %1341 = vrot.lane.b32.xlu0 %v1183, 122
      %v1342 = vpop.permute.xlu0 %1341
      %v1344 = vsel %vm1194, %v1340, 0
      %v1347 = vsel %vm735, %v1342, 0
      %1349 = vmatpush.bf16.msra.mxu0 0
      %1350 = vmatpush.bf16.msra.mxu0 0
      %1351 = vmatpush.bf16.msra.mxu0 0
      %1352 = vmatpush.bf16.msra.mxu0 0
      %1353 = vmatpush.bf16.msra.mxu0 0
      %1354 = vmatpush.bf16.msra.mxu0 0
      %1355 = vmatpush.bf16.msra.mxu0 0
      %1356 = vmatpush.bf16.msra.mxu0 %v1347
      %1357 = vmatmul.bf16.gmra.mxu0 %v1344
      %v1358 = vpop.f32.mrf.mxu0
      %v1359 = vadd.f32 0.0, %v1358
      %v1360 = vpop.f32.mrf.mxu0
      %v1361 = vadd.f32 0.0, %v1360
      %1362 = vdwg.mxu0
      %v1363 = vadd.f32 %v1337, %v1359
      %v1364 = vadd.f32 %v1338, %v1361
      %1365 = vrot.lane.b32.xlu0 %v1188, 72
      %v1366 = vpop.permute.xlu0 %1365
      %1367 = vrot.lane.b32.xlu0 %v1183, 121
      %v1368 = vpop.permute.xlu0 %1367
      %v1370 = vsel %vm1194, %v1366, 0
      %v1373 = vsel %vm735, %v1368, 0
      %1375 = vmatpush.bf16.msra.mxu0 0
      %1376 = vmatpush.bf16.msra.mxu0 0
      %1377 = vmatpush.bf16.msra.mxu0 0
      %1378 = vmatpush.bf16.msra.mxu0 0
      %1379 = vmatpush.bf16.msra.mxu0 0
      %1380 = vmatpush.bf16.msra.mxu0 0
      %1381 = vmatpush.bf16.msra.mxu0 0
      %1382 = vmatpush.bf16.msra.mxu0 %v1373
      %1383 = vmatmul.bf16.gmra.mxu0 %v1370
      %v1384 = vpop.f32.mrf.mxu0
      %v1385 = vadd.f32 0.0, %v1384
      %v1386 = vpop.f32.mrf.mxu0
      %v1387 = vadd.f32 0.0, %v1386
      %1388 = vdwg.mxu0
      %v1389 = vadd.f32 %v1363, %v1385
      %v1390 = vadd.f32 %v1364, %v1387
      %v1391 = vpack.c.bf16 %v1390, %v1389
      %v1392 = vmul.u32 %v987, 4
      %vm1393 = vcmp.eq.s32.totalorder %v978, %v1392
      %vm1394 = vcmp.eq.s32.totalorder %v979, %v1392
      %vm1395 = vcmp.eq.s32.totalorder %v980, %v1392
      %vm1396 = vcmp.eq.s32.totalorder %v981, %v1392
      %v1397 = vsel %vm1393, 1, 0
      %v1398 = vsel %vm1394, 1, 0
      %v1399 = vsel %vm1395, 1, 0
      %v1400 = vsel %vm1396, 1, 0
      %v1401 = vcvt.s32.f32 %v1397
      %v1402 = vcvt.s32.f32 %v1398
      %v1403 = vcvt.s32.f32 %v1399
      %v1404 = vcvt.s32.f32 %v1400
      %v1405 = vpack.c.bf16 %v1402, %v1401
      %v1406 = vpack.c.bf16 %v1404, %v1403
      %v1407 = vld [vmem:[%s14] sm:$0xff]
      %v1408 = vld [vmem:[%s14 + $0x8] sm:$0xff]
      %1410 = vset.pattern.permute.xlu0 0
      %1411 = vperm.xlu0 %1410, %v1407
      %v1412 = vpop.permute.xlu0 %1411
      %1415 = vset.pattern.permute.xlu0 0
      %1416 = vperm.xlu0 %1415, %v1408
      %v1417 = vpop.permute.xlu0 %1416
      %vm1419 = vcmask 236544
      %v1421 = vsel %vm1419, %v1391, 0
      %v1423 = vsel %vm805, 4294967295, 65535
      %v1424 = vsel %vm1027, %v1423, 0
      %v1426 = vand.u32 %v1406, %v1424
      %1428 = vmatpush.bf16.msra.mxu0 0
      %1429 = vmatpush.bf16.msra.mxu0 0
      %1430 = vmatpush.bf16.msra.mxu0 0
      %1431 = vmatpush.bf16.msra.mxu0 0
      %1432 = vmatpush.bf16.msra.mxu0 0
      %1433 = vmatpush.bf16.msra.mxu0 0
      %1434 = vmatpush.bf16.msra.mxu0 %v1426
      %1435 = vmatpush.bf16.msra.mxu0 %v1405
      %1436 = vmatmul.bf16.gmra.mxu0 %v1421
      %v1437 = vpop.f32.mrf.mxu0
      %v1438 = vadd.f32 %v1412, %v1437
      %v1439 = vpop.f32.mrf.mxu0
      %v1440 = vadd.f32 %v1417, %v1439
      %1441 = vdwg.mxu0
      %1442 = vst.msk [vmem:[#allocation11] sm:$0xff] %vm1194, %v1438
      %1443 = vst.msk [vmem:[#allocation11 + $0x8] sm:$0xff] %vm1194, %v1440
      %v1444 = vld [vmem:[#allocation11] sm:$0xff]
      %v1445 = vld [vmem:[#allocation11 + $0x8] sm:$0xff]
      %vm1446 = vcmp.gt.f32.partialorder %v1444, 0.0
      %vm1447 = vcmp.gt.f32.partialorder %v1445, 0.0
      %v1448 = vmin.f32 %v1444, 0.0
      %v1449 = vmin.f32 %v1445, 0.0
      %v1450 = vmul.f32 %v1448, 1.442695
      %v1451 = vpow.pop %v1450
      %v1452 = vmul.f32 %v1449, 1.442695
      %v1453 = vpow.pop %v1452
      %v1454 = vsub.f32 %v1451, 1.0
      %v1455 = vsub.f32 %v1453, 1.0
      %v1456 = vsel %vm1446, %v1444, %v1454
      %v1457 = vsel %vm1447, %v1445, %v1455
      %1460 = vrot.lane.b32.xlu0 %v1456, 3
      %v1461 = vpop.permute.xlu0 %1460
      %1462 = vrot.lane.b32.xlu0 %v1457, 3
      %v1463 = vpop.permute.xlu0 %1462
      %vm1466 = vcmask 89112
      %1467 = vst.msk [vmem:[#allocation12] sm:$0xff] %vm1466, %v1461
      %1468 = vst.msk [vmem:[#allocation12 + $0x8] sm:$0xff] %vm1466, %v1463
      %1469 = vrot.lane.b32.xlu0 %v1456, 125
      %v1470 = vpop.permute.xlu0 %1469
      %1471 = vrot.lane.b32.xlu0 %v1457, 125
      %v1472 = vpop.permute.xlu0 %1471
      %1475 = vst.msk [vmem:[#allocation12] sm:$0xff] %vm1065, %v1470
      %1476 = vst.msk [vmem:[#allocation12 + $0x8] sm:$0xff] %vm1065, %v1472
      %1477 = vrot.lane.b32.xlu0 %v1456, 127
      %v1478 = vpop.permute.xlu0 %1477
      %1479 = vrot.lane.b32.xlu0 %v1457, 127
      %v1480 = vpop.permute.xlu0 %1479
      %1483 = vst.msk [vmem:[#allocation12] sm:$0xff] %vm1168, %v1478
      %1484 = vst.msk [vmem:[#allocation12 + $0x8] sm:$0xff] %vm1168, %v1480
      %1485 = vrot.lane.b32.xlu0 %v1456, 1
      %v1486 = vpop.permute.xlu0 %1485
      %1487 = vrot.lane.b32.xlu0 %v1457, 1
      %v1488 = vpop.permute.xlu0 %1487
      %vm1491 = vcmask 23568
      %1492 = vst.msk [vmem:[#allocation12] sm:$0xff] %vm1491, %v1486
      %1493 = vst.msk [vmem:[#allocation12 + $0x8] sm:$0xff] %vm1491, %v1488
      %1494 = vrot.lane.b32.xlu0 %v1456, 5
      %v1495 = vpop.permute.xlu0 %1494
      %1496 = vrot.lane.b32.xlu0 %v1457, 5
      %v1497 = vpop.permute.xlu0 %1496
      %vm1500 = vcmask 97368
      %1501 = vst.msk [vmem:[#allocation12] sm:$0xff] %vm1500, %v1495
      %1502 = vst.msk [vmem:[#allocation12 + $0x8] sm:$0xff] %vm1500, %v1497
      %1503 = vrot.lane.b32.xlu0 %v1456, 7
      %v1504 = vpop.permute.xlu0 %1503
      %1505 = vrot.lane.b32.xlu0 %v1457, 7
      %v1506 = vpop.permute.xlu0 %1505
      %vm1509 = vcmask 105568
      %1510 = vst.msk [vmem:[#allocation12] sm:$0xff] %vm1509, %v1504
      %1511 = vst.msk [vmem:[#allocation12 + $0x8] sm:$0xff] %vm1509, %v1506
      %1512 = vrot.lane.b32.xlu0 %v1456, 9
      %v1513 = vpop.permute.xlu0 %1512
      %1514 = vrot.lane.b32.xlu0 %v1457, 9
      %v1515 = vpop.permute.xlu0 %1514
      %vm1518 = vcmask 113768
      %1519 = vst.msk [vmem:[#allocation12] sm:$0xff] %vm1518, %v1513
      %1520 = vst.msk [vmem:[#allocation12 + $0x8] sm:$0xff] %vm1518, %v1515
      %v1521 = vld [vmem:[#allocation12] sm:$0xff]
      %v1522 = vld [vmem:[#allocation12 + $0x8] sm:$0xff]
      %1523 = vst.msk [vmem:[#allocation13] sm:$0xff] %vm1194, %v1521
      %1524 = vst.msk [vmem:[#allocation13 + $0x8] sm:$0xff] %vm1194, %v1522
      %v1525 = vld [vmem:[#allocation12] sm:$0xff]
      %v1526 = vld [vmem:[#allocation12 + $0x8] sm:$0xff]
      %1529 = vrot.lane.b32.xlu0 %v1525, 127
      %v1530 = vpop.permute.xlu0 %1529
      %1531 = vrot.lane.b32.xlu0 %v1526, 127
      %v1532 = vpop.permute.xlu0 %1531
      %1535 = vst.msk [vmem:[#allocation13 + $0x10] sm:$0xff] %vm1194, %v1530
      %1536 = vst.msk [vmem:[#allocation13 + $0x18] sm:$0xff] %vm1194, %v1532
      %v1537 = vld [vmem:[#allocation12] sm:$0xff]
      %v1538 = vld [vmem:[#allocation12 + $0x8] sm:$0xff]
      %1541 = vrot.lane.b32.xlu0 %v1537, 126
      %v1542 = vpop.permute.xlu0 %1541
      %1543 = vrot.lane.b32.xlu0 %v1538, 126
      %v1544 = vpop.permute.xlu0 %1543
      %1547 = vst.msk [vmem:[#allocation13 + $0x20] sm:$0xff] %vm1194, %v1542
      %1548 = vst.msk [vmem:[#allocation13 + $0x28] sm:$0xff] %vm1194, %v1544
      %v1549 = vld [vmem:[#allocation12] sm:$0xff]
      %v1550 = vld [vmem:[#allocation12 + $0x8] sm:$0xff]
      %1553 = vrot.lane.b32.xlu0 %v1549, 125
      %v1554 = vpop.permute.xlu0 %1553
      %1555 = vrot.lane.b32.xlu0 %v1550, 125
      %v1556 = vpop.permute.xlu0 %1555
      %1559 = vst.msk [vmem:[#allocation13 + $0x30] sm:$0xff] %vm1194, %v1554
      %1560 = vst.msk [vmem:[#allocation13 + $0x38] sm:$0xff] %vm1194, %v1556
      %v1561 = vld [vmem:[#allocation12] sm:$0xff]
      %v1562 = vld [vmem:[#allocation12 + $0x8] sm:$0xff]
      %1565 = vrot.lane.b32.xlu0 %v1561, 124
      %v1566 = vpop.permute.xlu0 %1565
      %1567 = vrot.lane.b32.xlu0 %v1562, 124
      %v1568 = vpop.permute.xlu0 %1567
      %1571 = vst.msk [vmem:[#allocation13 + $0x40] sm:$0xff] %vm1194, %v1566
      %1572 = vst.msk [vmem:[#allocation13 + $0x48] sm:$0xff] %vm1194, %v1568
      %v1573 = vld [vmem:[#allocation12] sm:$0xff]
      %v1574 = vld [vmem:[#allocation12 + $0x8] sm:$0xff]
      %1577 = vrot.lane.b32.xlu0 %v1573, 123
      %v1578 = vpop.permute.xlu0 %1577
      %1579 = vrot.lane.b32.xlu0 %v1574, 123
      %v1580 = vpop.permute.xlu0 %1579
      %1583 = vst.msk [vmem:[#allocation13 + $0x50] sm:$0xff] %vm1194, %v1578
      %1584 = vst.msk [vmem:[#allocation13 + $0x58] sm:$0xff] %vm1194, %v1580
      %v1585 = vld [vmem:[#allocation12] sm:$0xff]
      %v1586 = vld [vmem:[#allocation12 + $0x8] sm:$0xff]
      %1589 = vrot.lane.b32.xlu0 %v1585, 122
      %v1590 = vpop.permute.xlu0 %1589
      %1591 = vrot.lane.b32.xlu0 %v1586, 122
      %v1592 = vpop.permute.xlu0 %1591
      %1595 = vst.msk [vmem:[#allocation13 + $0x60] sm:$0xff] %vm1194, %v1590
      %1596 = vst.msk [vmem:[#allocation13 + $0x68] sm:$0xff] %vm1194, %v1592
      %v1597 = vld [vmem:[%s15] sm:$0xf]
      %v1598 = vld [vmem:[%s15 + $0x4] sm:$0xf]
      %v1599 = vld [vmem:[#allocation13] sm:$0xff]
      %v1600 = vld [vmem:[#allocation13 + $0x8] sm:$0xff]
      %v1601 = vld [vmem:[#allocation13 + $0x10] sm:$0xff]
      %v1602 = vld [vmem:[#allocation13 + $0x18] sm:$0xff]
      %v1603 = vld [vmem:[#allocation13 + $0x20] sm:$0xff]
      %v1604 = vld [vmem:[#allocation13 + $0x28] sm:$0xff]
      %v1605 = vld [vmem:[#allocation13 + $0x30] sm:$0xff]
      %v1606 = vld [vmem:[#allocation13 + $0x38] sm:$0xff]
      %v1607 = vld [vmem:[#allocation13 + $0x40] sm:$0xff]
      %v1608 = vld [vmem:[#allocation13 + $0x48] sm:$0xff]
      %v1609 = vld [vmem:[#allocation13 + $0x50] sm:$0xff]
      %v1610 = vld [vmem:[#allocation13 + $0x58] sm:$0xff]
      %v1611 = vld [vmem:[#allocation13 + $0x60] sm:$0xff]
      %v1612 = vld [vmem:[#allocation13 + $0x68] sm:$0xff]
      %v1613 = vpack.c.bf16 %v1600, %v1599
      %v1614 = vpack.c.bf16 %v1602, %v1601
      %v1615 = vpack.c.bf16 %v1604, %v1603
      %v1616 = vpack.c.bf16 %v1606, %v1605
      %v1617 = vpack.c.bf16 %v1608, %v1607
      %v1618 = vpack.c.bf16 %v1610, %v1609
      %v1619 = vpack.c.bf16 %v1612, %v1611
      %v1620 = vld [vmem:[%s16] sm:$0xff]
      %v1621 = vld [vmem:[%s16 + $0x8] sm:$0xff]
      %1623 = vset.pattern.permute.xlu0 0
      %1624 = vperm.xlu0 %1623, %v1620
      %v1625 = vpop.permute.xlu0 %1624
      %1628 = vset.pattern.permute.xlu0 0
      %1629 = vperm.xlu0 %1628, %v1621
      %v1630 = vpop.permute.xlu0 %1629
      %v1634 = vunpack.c.l.b16 %v1597
      %v1635 = vunpack.c.l.b16 %v1598
      %v1636 = vpack.c.b16 %v1635, %v1634
      %vm1637 = vcmask 916480
      %v1639 = vsel %vm1637, %v1636, 0
      %1641 = vmatpush.bf16.msra.mxu0 0
      %1642 = vmatpush.bf16.msra.mxu0 %v1619
      %1643 = vmatpush.bf16.msra.mxu0 %v1618
      %1644 = vmatpush.bf16.msra.mxu0 %v1617
      %1645 = vmatpush.bf16.msra.mxu0 %v1616
      %1646 = vmatpush.bf16.msra.mxu0 %v1615
      %1647 = vmatpush.bf16.msra.mxu0 %v1614
      %1648 = vmatpush.bf16.msra.mxu0 %v1613
      %1649 = vmatmul.bf16.gmra.mxu0 %v1639
      %v1650 = vpop.f32.mrf.mxu0
      %v1651 = vadd.f32 %v1625, %v1650
      %v1652 = vpop.f32.mrf.mxu0
      %v1653 = vadd.f32 %v1630, %v1652
      %1654 = vdwg.mxu0
      %v1655 = vld [vmem:[%s17] sm:$0xf]
      %v1656 = vld [vmem:[%s17 + $0x4] sm:$0xf]
      %v1657 = vld [vmem:[%s17 + $0x8] sm:$0xf]
      %v1658 = vld [vmem:[%s17 + $0xc] sm:$0xf]
      %v1659 = vld [vmem:[%s17 + $0x10] sm:$0xf]
      %v1660 = vld [vmem:[%s17 + $0x14] sm:$0xf]
      %v1661 = vpack.c.bf16 %v1653, %v1651
      %v1662 = vld [vmem:[%s18] sm:$0xff]
      %v1663 = vld [vmem:[%s18 + $0x8] sm:$0xff]
      %v1664 = vld [vmem:[%s18 + $0x10] sm:$0xff]
      %v1665 = vld [vmem:[%s18 + $0x18] sm:$0xff]
      %v1666 = vld [vmem:[%s18 + $0x20] sm:$0xff]
      %v1667 = vld [vmem:[%s18 + $0x28] sm:$0xff]
      %1669 = vset.pattern.permute.xlu0 0
      %1670 = vperm.xlu0 %1669, %v1662
      %v1671 = vpop.permute.xlu0 %1670
      %1674 = vset.pattern.permute.xlu0 0
      %1675 = vperm.xlu0 %1674, %v1663
      %v1676 = vpop.permute.xlu0 %1675
      %1679 = vset.pattern.permute.xlu0 0
      %1680 = vperm.xlu0 %1679, %v1664
      %v1681 = vpop.permute.xlu0 %1680
      %1684 = vset.pattern.permute.xlu0 0
      %1685 = vperm.xlu0 %1684, %v1665
      %v1686 = vpop.permute.xlu0 %1685
      %1689 = vset.pattern.permute.xlu0 0
      %1690 = vperm.xlu0 %1689, %v1666
      %v1691 = vpop.permute.xlu0 %1690
      %1694 = vset.pattern.permute.xlu0 0
      %1695 = vperm.xlu0 %1694, %v1667
      %v1696 = vpop.permute.xlu0 %1695
      %v1704 = vunpack.c.l.b16 %v1655
      %v1705 = vunpack.c.l.b16 %v1656
      %v1706 = vunpack.c.l.b16 %v1657
      %v1707 = vunpack.c.l.b16 %v1658
      %v1708 = vunpack.c.l.b16 %v1659
      %v1709 = vunpack.c.l.b16 %v1660
      %v1710 = vpack.c.b16 %v1705, %v1704
      %v1711 = vpack.c.b16 %v1707, %v1706
      %v1712 = vpack.c.b16 %v1709, %v1708
      %vm1713 = vcmask 130048
      %v1715 = vsel %vm1713, %v1710, 0
      %v1718 = vsel %vm1713, %v1711, 0
      %v1721 = vsel %vm1713, %v1712, 0
      %1723 = vmatpush.bf16.msra.mxu0 0
      %1724 = vmatpush.bf16.msra.mxu0 0
      %1725 = vmatpush.bf16.msra.mxu0 0
      %1726 = vmatpush.bf16.msra.mxu0 0
      %1727 = vmatpush.bf16.msra.mxu0 0
      %1728 = vmatpush.bf16.msra.mxu0 0
      %1729 = vmatpush.bf16.msra.mxu0 0
      %1730 = vmatpush.bf16.msra.mxu0 %v1661
      %1731 = vmatmul.bf16.gmra.mxu0 %v1715
      %v1732 = vpop.f32.mrf.mxu0
      %v1733 = vadd.f32 %v1671, %v1732
      %v1734 = vpop.f32.mrf.mxu0
      %v1735 = vadd.f32 %v1676, %v1734
      %1736 = vmatmul.bf16.gmra.mxu0 %v1718
      %v1737 = vpop.f32.mrf.mxu0
      %v1738 = vadd.f32 %v1681, %v1737
      %v1739 = vpop.f32.mrf.mxu0
      %v1740 = vadd.f32 %v1686, %v1739
      %1741 = vmatmul.bf16.gmra.mxu0 %v1721
      %v1742 = vpop.f32.mrf.mxu0
      %v1743 = vadd.f32 %v1691, %v1742
      %v1744 = vpop.f32.mrf.mxu0
      %v1745 = vadd.f32 %v1696, %v1744
      %1746 = vdwg.mxu0
      %v1747 = vsub.f32 %v1735, %v1733
      %v1748 = vand.u32 2147483647, %v1747
      %v1749 = vsub.f32 0.0, %v1748
      %v1750 = vmul.f32 %v1749, 1.442695
      %v1751 = vpow.pop %v1750
      %vm1752 = vcmp.ge.f32.partialorder %v1747, 0.0
      %v1753 = vadd.f32 %v1751, 1.0
      %v1754 = vrcp.pop %v1753
      %v1755 = vmul.f32 %v1753, %v1754
      %v1756 = vsub.f32 1.0, %v1755
      %v1757 = vmul.f32 %v1754, %v1756
      %v1758 = vadd.f32 %v1754, %v1757
      %vm1759 = vweird.f32 %v1753
      %vm1760 = vweird.f32 %v1754
      %vm1761 = vmor %vm1759, %vm1760
      %v1762 = vsel %vm1761, %v1754, %v1758
      %v1763 = vand.u32 2147483647, %v1753
      %vm1764 = vcmp.eq.f32.partialorder %v1763, 8.507059e+37
      %v1765 = vand.u32 %v1753, 2147483648
      %v1766 = vor.u32 1.1754944e-38, %v1765
      %v1767 = vsel %vm1764, %v1766, %v1762
      %v1768 = vmul.f32 1.0, %v1767
      %v1769 = vmul.f32 %v1751, %v1767
      %v1770 = vsel %vm1752, %v1768, %v1769
      %v1771 = vsub.f32 1.0, %v1770
      %1772 = vst.msk [vmem:[%s631] sm:$0xff] %vm1194, %v1771
      %s1773 = scalar_lea.vmem %s631, 8
      %1774 = vst.msk [vmem:[%s1773] sm:$0xff] %vm1194, %v1770
      %1775 = vst.msk [vmem:[%s636] sm:$0xff] %vm1194, %v1738
      %1776 = vst.msk [vmem:[%s636 + $0x8] sm:$0xff] %vm1194, %v1740
      %1777 = vst.msk [vmem:[%s636 + $0x10] sm:$0xff] %vm1194, %v1743
      %1778 = vst.msk [vmem:[%s636 + $0x18] sm:$0xff] %vm1194, %v1745
      %p1779 = scmp.lt.s32.totalorder %s32, 1
      %s1780 = scalar_select %p1779, %s32, 1
      %s1781 = smul.addr %s1780, 2
      %s1782 = smul.addr %s1781, 8
      %s1783 = scalar_lea.vmem %s19, %s1782
      %p1784 = scmp.lt.s32.totalorder %s32, 1
      %s1785 = scalar_select %p1784, %s32, 1
      %s1786 = smul.addr %s1785, 4
      %s1787 = smul.addr %s1786, 8
      %s1788 = scalar_lea.vmem %s20, %s1787
      // Predicated region
      $region97: #{_lambda_.1} parent=95 // pred_check
        %p1789 = pneg %p454
      $region98: #{_lambda_.1} parent=95 // pred_check_branch
        %1791 = sbr.rel (%p1789) target = $region100
      $region99: #{_lambda_.1} parent=95 // pred_region
        _
      $region100: #{_lambda_.1} parent=95 // pred_fallthru
        _
      // Predicated region
      $region101: #{_lambda_.1} parent=95 // pred_check
        %p1792 = pneg %p480
      $region102: #{_lambda_.1} parent=95 // pred_check_branch
        %1794 = sbr.rel (%p1792) target = $region104
      $region103: #{_lambda_.1} parent=95 // pred_region
        _
      $region104: #{_lambda_.1} parent=95 // pred_fallthru
        _
    $region96: #{_lambda_.1} parent=5 // pred_fallthru
      _
    %p1795 = scmp.le.s32.totalorder 2, %s27
    // Predicated region
    $region105: #{_lambda_.1} parent=5 // pred_check
      %p1796 = pneg %p1795
    $region106: #{_lambda_.1} parent=5 // pred_check_branch
      %1798 = sbr.rel (%p1796) target = $region108
    $region107: #{_lambda_.1} parent=5 // pred_region
      %s1799 = ssub.s32 %s27, 2
      // Predicated region
      $region109: #{_lambda_.1} parent=107 // pred_check
        %p1800 = pneg %p460
      $region110: #{_lambda_.1} parent=107 // pred_check_branch
        %1802 = sbr.rel (%p1800) target = $region112
      $region111: #{_lambda_.1} parent=107 // pred_region
        %p1803 = scmp.lt.s32.totalorder %s33, 1
        %s1804 = scalar_select %p1803, %s33, 1
        %s1805 = smul.addr %s1804, 2
        %s1806 = smul.addr %s1805, 8
        %s1807 = scalar_lea.vmem %s19, %s1806
      $region112: #{_lambda_.1} parent=107 // pred_fallthru
        _
      // Predicated region
      $region113: #{_lambda_.1} parent=107 // pred_check
        %p1808 = pneg %p486
      $region114: #{_lambda_.1} parent=107 // pred_check_branch
        %1810 = sbr.rel (%p1808) target = $region116
      $region115: #{_lambda_.1} parent=107 // pred_region
        %p1811 = scmp.lt.s32.totalorder %s33, 1
        %s1812 = scalar_select %p1811, %s33, 1
        %s1813 = smul.addr %s1812, 4
        %s1814 = smul.addr %s1813, 8
        %s1815 = scalar_lea.vmem %s20, %s1814
      $region116: #{_lambda_.1} parent=107 // pred_fallthru
        _
    $region108: #{_lambda_.1} parent=5 // pred_fallthru
      _
  $region6: #{_lambda_.1} parent=0 // loop_footer
    %s31 = sadd.s32 1, %s27
  $region7: #{_lambda_.1} parent=0 // loop_footer_branch
    %26 = sbr.rel target = $region3
  $region8: #{_lambda_.1} parent=0 // loop_exit
    _

</llo_original>
